<compile_context>
chip_gen: v6e
topology: v6e:2x2x1
jax: 0.10.0
libtpu: 0.0.40
codegen_flags: <defaults>
</compile_context>

<pallas_src>
import functools

import jax
import jax.numpy as jnp
from jax.experimental import pallas as pl
from jax.experimental.pallas import tpu as pltpu

FEATURE_DIM = 7
FEATURE_PAD = 8            # 7 zero-padded to 8 so the packed K dim is aligned
DMODEL = 64
DEPTH = 10
OUTPUT_DIMS = 64


def _round_up(x, m):
    return ((x + m - 1) // m) * m


def _cdiv(a, b):
    return -(-a // b)


def _tpu_pack_config():
    """Returns (pack, epilogue_bf16) based on the TPU generation.

    v6e / v7x: 256x256 MXU + bf16 VPU  -> pack 4 samples per row, bf16 epilogue.
    v5e and older (128x128 MXU, no bf16 VPU) -> pack 2, f32 epilogue.
    """
    try:
        kind = jax.devices()[0].device_kind.lower()
    except Exception:
        return 2, False
    if any(tag in kind for tag in ("v2", "v3", "v4", "v5")):
        return 2, False
    if "tpu" in kind or jax.default_backend() == "tpu":
        return 4, True
    return 2, False


def _block_diag(w, pack):
    """[K, N] -> block-diagonal with `pack` copies: [pack*K, pack*N]."""
    K, N = w.shape
    out = jnp.zeros((pack * K, pack * N), w.dtype)
    for j in range(pack):
        out = out.at[j * K:(j + 1) * K, j * N:(j + 1) * N].set(w)
    return out


def pack_params(params, *, pack, use_bf16=True, epilogue_bf16=False):
    """Host-side, one-time weight prep for the lane-packed kernel."""
    w0, b0, wh, bh, wo, bo = params
    wdt = jnp.bfloat16 if use_bf16 else jnp.float32
    edt = jnp.bfloat16 if epilogue_bf16 else jnp.float32

    # Pad the 7-wide feature dim to 8 (the zero row contributes exactly 0).
    w0p = jnp.zeros((FEATURE_PAD, DMODEL), jnp.float32).at[:FEATURE_DIM, :].set(w0)

    w0_b = _block_diag(w0p, pack).astype(wdt)                        # [8p, 64p]
    b0_b = jnp.tile(b0, (1, pack)).astype(edt)                       # [1, 64p]
    wh_b = jnp.stack([_block_diag(wh[i], pack) for i in range(DEPTH)]
                     ).astype(wdt)                                   # [D, 64p, 64p]
    bh_b = jnp.tile(bh, (1, 1, pack)).astype(edt)                    # [D, 1, 64p]
    wo_b = _block_diag(wo, pack).astype(wdt)                         # [64p, 64p]
    bo_b = jnp.tile(bo, (1, pack)).astype(edt)                       # [1, 64p]
    return w0_b, b0_b, wh_b, bh_b, wo_b, bo_b


def _fc_encoder_kernel(x_ref, w0_ref, b0_ref, wh_ref, bh_ref, wo_ref, bo_ref,
                       o_ref, *, chunk, depth):
    wdt = w0_ref.dtype          # matmul operand dtype (bf16 or f32)
    edt = b0_ref.dtype          # bias-add / ReLU epilogue dtype
    n_chunks = x_ref.shape[0] // chunk   # static: tile is a multiple of chunk

    def chunk_body(c, carry):
        r0 = pl.multiple_of(c * chunk, chunk)
        xc = x_ref[pl.ds(r0, chunk), :]

        # Input linear (packed 8p -> 64p) + ReLU. f32 accumulation on the MXU,
        # bias-add / ReLU on the VPU in `edt`.
        h = jnp.dot(xc.astype(wdt), w0_ref[...],
                    preferred_element_type=jnp.float32)
        h = jnp.maximum(h.astype(edt) + b0_ref[...], 0.0).astype(wdt)

        # Hidden stack: DEPTH x (block-diagonal 64p -> 64p Linear + ReLU).
        for i in range(depth):   # static unroll; depth small & fixed
            h = jnp.dot(h, wh_ref[i], preferred_element_type=jnp.float32)
            h = jnp.maximum(h.astype(edt) + bh_ref[i], 0.0).astype(wdt)

        # Output linear (block-diagonal 64p -> 64p), no activation.
        out = jnp.dot(h, wo_ref[...], preferred_element_type=jnp.float32)
        o_ref[pl.ds(r0, chunk), :] = (out + bo_ref[...]).astype(o_ref.dtype)
        return carry

    jax.lax.fori_loop(0, n_chunks, chunk_body, 0)


def fc_encoder_forward(x, packed_params, *, pack, batch_tile=1024):
    """x: [B, FEATURE_DIM] f32 -> [B, OUTPUT_DIMS] f32.

    `pack` samples share one physical row; `batch_tile` is the outer grid tile
    in packed rows.  The grid is forced to >=2 steps whenever at least two
    inner chunks of work exist (v7x megacore), and activations are kept
    register-resident per CHUNK rows by the in-kernel sub-block loop.
    """
    w0_b, b0_b, wh_b, bh_b, wo_b, bo_b = packed_params
    B, F = x.shape
    assert F == FEATURE_DIM

    packed_in = pack * FEATURE_PAD
    packed_d = w0_b.shape[1]
    packed_out = wo_b.shape[1]
    chunk = max(8, 256 // pack)              # 128 rows @ pack=2, 64 @ pack=4

    rows = _cdiv(B, pack)                    # packed rows needed
    min_steps = 2 if rows >= 2 * chunk else 1
    num_steps = max(min_steps, _cdiv(rows, batch_tile))
    tile = _round_up(_cdiv(rows, num_steps), chunk)
    rows_pad = _round_up(rows, tile)
    grid = (rows_pad // tile,)
    b_pad = pack * rows_pad

    # Zero-pad batch + feature dims, then pack `pack` samples per physical row
    # (free row-major reshape): [b_pad, 8] -> [rows_pad, 8*pack].
    xp = jnp.zeros((b_pad, FEATURE_PAD), jnp.float32).at[:B, :FEATURE_DIM].set(x)
    xp = xp.reshape(rows_pad, packed_in)

    flops = 2 * rows_pad * (packed_in * packed_d
                            + DEPTH * packed_d * packed_d
                            + packed_d * packed_out)
    bytes_accessed = (xp.size * xp.dtype.itemsize
                      + rows_pad * packed_out * 4
                      + sum(int(p.size) * p.dtype.itemsize
                            for p in packed_params))

    # Weights/biases are small (<1.5 MB even at pack=4): each is a single
    # full-array VMEM block replicated across the batch grid.
    def rep(shape):
        return pl.BlockSpec(shape, lambda i: tuple(0 for _ in shape))

    kernel = functools.partial(_fc_encoder_kernel, chunk=chunk, depth=DEPTH)

    out_p = pl.pallas_call(
        kernel,
        out_shape=jax.ShapeDtypeStruct((rows_pad, packed_out), jnp.float32),
        grid_spec=pltpu.PrefetchScalarGridSpec(
            num_scalar_prefetch=0,
            grid=grid,
            in_specs=[
                pl.BlockSpec((tile, packed_in), lambda i: (i, 0)),  # x (packed)
                rep((packed_in, packed_d)),        # w0 blockdiag
                rep((1, packed_d)),                # b0
                rep((DEPTH, packed_d, packed_d)),  # hidden weights blockdiag
                rep((DEPTH, 1, packed_d)),         # hidden biases
                rep((packed_d, packed_out)),       # wo blockdiag
                rep((1, packed_out)),              # bo
            ],
            out_specs=pl.BlockSpec((tile, packed_out), lambda i: (i, 0)),
        ),
        compiler_params=pltpu.CompilerParams(
            dimension_semantics=("parallel",)),
        cost_estimate=pl.CostEstimate(
            flops=flops, transcendentals=0, bytes_accessed=bytes_accessed),
    )(xp, w0_b, b0_b, wh_b, bh_b, wo_b, bo_b)

    # Unpack lanes back to batch rows (free row-major reshape), drop padding.
    return out_p.reshape(b_pad, OUTPUT_DIMS)[:B]


def init_params(key):
    """Deterministic torch-Linear-style init (uniform(-1/sqrt(fan_in), +))."""
    ks = jax.random.split(key, 3)

    def linear_init(k, fan_in, fan_out):
        bound = 1.0 / jnp.sqrt(fan_in)
        kw, kb = jax.random.split(k)
        w = jax.random.uniform(kw, (fan_in, fan_out), jnp.float32, -bound, bound)
        b = jax.random.uniform(kb, (1, fan_out), jnp.float32, -bound, bound)
        return w, b

    w0, b0 = linear_init(ks[0], FEATURE_DIM, DMODEL)

    wh_list, bh_list = [], []
    hidden_keys = jax.random.split(ks[1], DEPTH)
    for i in range(DEPTH):
        w, b = linear_init(hidden_keys[i], DMODEL, DMODEL)
        wh_list.append(w)
        bh_list.append(b)
    wh = jnp.stack(wh_list, axis=0)           # [DEPTH, DMODEL, DMODEL]
    bh = jnp.stack(bh_list, axis=0)           # [DEPTH, 1, DMODEL]

    wo, bo = linear_init(ks[2], DMODEL, OUTPUT_DIMS)
    return w0, b0, wh, bh, wo, bo


def reference_forward(x, params):
    w0, b0, wh, bh, wo, bo = params
    h = jnp.maximum(x @ w0 + b0, 0.0)
    for i in range(DEPTH):
        h = jnp.maximum(h @ wh[i] + bh[i], 0.0)
    return h @ wo + bo


if __name__ == "__main__":
    key = jax.random.PRNGKey(0)
    kx, kp = jax.random.split(key)

    pack, epi_bf16 = _tpu_pack_config()
    params = init_params(kp)
    packed = pack_params(params, pack=pack, use_bf16=True,
                         epilogue_bf16=epi_bf16)

    # Case 1: moderate batch -> >=2 grid steps (megacore path).
    B = 512
    x = jax.random.normal(kx, (B, FEATURE_DIM), jnp.float32)
    out = jax.block_until_ready(fc_encoder_forward(x, packed, pack=pack))
    ref = reference_forward(x, params)
    assert out.shape == (B, OUTPUT_DIMS)
    # bf16 matmul operands (f32 accumulation) -> loose tolerance vs f32 ref.
    assert jnp.allclose(out, ref, atol=3e-2, rtol=3e-2), (
        "mismatch vs reference, max abs err = "
        f"{float(jnp.max(jnp.abs(out - ref)))}")

    # Case 2: small, non-multiple batch (exercises padding + single-step grid).
    B2 = 100
    x2 = jax.random.normal(jax.random.fold_in(kx, 1), (B2, FEATURE_DIM),
                           jnp.float32)
    out2 = jax.block_until_ready(fc_encoder_forward(x2, packed, pack=pack))
    ref2 = reference_forward(x2, params)
    assert out2.shape == (B2, OUTPUT_DIMS)
    assert jnp.allclose(out2, ref2, atol=3e-2, rtol=3e-2), (
        "mismatch vs reference (small-batch path), max abs err = "
        f"{float(jnp.max(jnp.abs(out2 - ref2)))}")

    print("KERNEL_OK")
</pallas_src>

<mosaic_0001>
module attributes {stable_mosaic.version = 11 : i64} {
  func.func @_fc_encoder_kernel(%arg0: i32, %arg1: memref<128x16xf32, #tpu.memory_space<vmem>>, %arg2: memref<16x128xbf16, #tpu.memory_space<vmem>>, %arg3: memref<1x128xf32, #tpu.memory_space<vmem>>, %arg4: memref<10x128x128xbf16, #tpu.memory_space<vmem>>, %arg5: memref<10x1x128xf32, #tpu.memory_space<vmem>>, %arg6: memref<128x128xbf16, #tpu.memory_space<vmem>>, %arg7: memref<1x128xf32, #tpu.memory_space<vmem>>, %arg8: memref<128x128xf32, #tpu.memory_space<vmem>>) attributes {dimension_semantics = [#tpu.dimension_semantics<parallel>], iteration_bounds = array<i64: 2>, scalar_prefetch = 0 : i64, scratch_operands = 0 : i64, tpu.core_type = #tpu.core_type<tc>, window_params = [{transform_indices = @transform_0, window_bounds = array<i64: 128, 16>}, {pipeline_mode = #tpu.pipeline_mode<synchronous>, transform_indices = @transform_1, window_bounds = array<i64: 16, 128>}, {pipeline_mode = #tpu.pipeline_mode<synchronous>, transform_indices = @transform_2, window_bounds = array<i64: 1, 128>}, {pipeline_mode = #tpu.pipeline_mode<synchronous>, transform_indices = @transform_3, window_bounds = array<i64: 10, 128, 128>}, {pipeline_mode = #tpu.pipeline_mode<synchronous>, transform_indices = @transform_4, window_bounds = array<i64: 10, 1, 128>}, {pipeline_mode = #tpu.pipeline_mode<synchronous>, transform_indices = @transform_5, window_bounds = array<i64: 128, 128>}, {pipeline_mode = #tpu.pipeline_mode<synchronous>, transform_indices = @transform_6, window_bounds = array<i64: 1, 128>}, {transform_indices = @transform_7, window_bounds = array<i64: 128, 128>}]} {
    %c0_i32 = arith.constant 0 : i32
    %c128_i32 = arith.constant 128 : i32
    %0 = arith.muli %c0_i32, %c128_i32 : i32
    %1 = tpu.assume_multiple %0, 128 : i32
    %2 = arith.index_cast %1 : i32 to index
    %c0 = arith.constant 0 : index
    %3 = vector.load %arg1[%2, %c0] : memref<128x16xf32, #tpu.memory_space<vmem>>, vector<128x16xf32>
    %4 = arith.truncf %3 : vector<128x16xf32> to vector<128x16xbf16>
    %c0_0 = arith.constant 0 : index
    %c0_1 = arith.constant 0 : index
    %5 = vector.load %arg2[%c0_0, %c0_1] : memref<16x128xbf16, #tpu.memory_space<vmem>>, vector<16x128xbf16>
    %cst = arith.constant dense<0.000000e+00> : vector<128x128xf32>
    %6 = tpu.matmul %4, %5, %cst {dimension_numbers = #tpu.dot_dimension_numbers<[1], [0], [0], [1], [0, 0, 1, 1], [], []>} : vector<128x16xbf16>, vector<16x128xbf16>, vector<128x128xf32> -> vector<128x128xf32>
    %c0_2 = arith.constant 0 : index
    %c0_3 = arith.constant 0 : index
    %7 = vector.load %arg3[%c0_2, %c0_3] : memref<1x128xf32, #tpu.memory_space<vmem>>, vector<1x128xf32>
    %8 = vector.broadcast %7 : vector<1x128xf32> to vector<128x128xf32>
    %9 = arith.addf %6, %8 : vector<128x128xf32>
    %cst_4 = arith.constant 0.000000e+00 : f32
    %10 = vector.broadcast %cst_4 : f32 to vector<128x128xf32>
    %11 = arith.maximumf %9, %10 : vector<128x128xf32>
    %12 = arith.truncf %11 : vector<128x128xf32> to vector<128x128xbf16>
    %c0_5 = arith.constant 0 : index
    %c0_6 = arith.constant 0 : index
    %c0_7 = arith.constant 0 : index
    %13 = vector.load %arg4[%c0_5, %c0_6, %c0_7] : memref<10x128x128xbf16, #tpu.memory_space<vmem>>, vector<1x128x128xbf16>
    %14 = vector.shape_cast %13 : vector<1x128x128xbf16> to vector<128x128xbf16>
    %cst_8 = arith.constant dense<0.000000e+00> : vector<128x128xf32>
    %15 = tpu.matmul %12, %14, %cst_8 {dimension_numbers = #tpu.dot_dimension_numbers<[1], [0], [0], [1], [0, 0, 1, 1], [], []>} : vector<128x128xbf16>, vector<128x128xbf16>, vector<128x128xf32> -> vector<128x128xf32>
    %c0_9 = arith.constant 0 : index
    %c0_10 = arith.constant 0 : index
    %c0_11 = arith.constant 0 : index
    %16 = vector.load %arg5[%c0_9, %c0_10, %c0_11] : memref<10x1x128xf32, #tpu.memory_space<vmem>>, vector<1x1x128xf32>
    %17 = vector.shape_cast %16 : vector<1x1x128xf32> to vector<1x128xf32>
    %18 = vector.broadcast %17 : vector<1x128xf32> to vector<128x128xf32>
    %19 = arith.addf %15, %18 : vector<128x128xf32>
    %cst_12 = arith.constant 0.000000e+00 : f32
    %20 = vector.broadcast %cst_12 : f32 to vector<128x128xf32>
    %21 = arith.maximumf %19, %20 : vector<128x128xf32>
    %22 = arith.truncf %21 : vector<128x128xf32> to vector<128x128xbf16>
    %c1 = arith.constant 1 : index
    %c0_13 = arith.constant 0 : index
    %c0_14 = arith.constant 0 : index
    %23 = vector.load %arg4[%c1, %c0_13, %c0_14] : memref<10x128x128xbf16, #tpu.memory_space<vmem>>, vector<1x128x128xbf16>
    %24 = vector.shape_cast %23 : vector<1x128x128xbf16> to vector<128x128xbf16>
    %cst_15 = arith.constant dense<0.000000e+00> : vector<128x128xf32>
    %25 = tpu.matmul %22, %24, %cst_15 {dimension_numbers = #tpu.dot_dimension_numbers<[1], [0], [0], [1], [0, 0, 1, 1], [], []>} : vector<128x128xbf16>, vector<128x128xbf16>, vector<128x128xf32> -> vector<128x128xf32>
    %c1_16 = arith.constant 1 : index
    %c0_17 = arith.constant 0 : index
    %c0_18 = arith.constant 0 : index
    %26 = vector.load %arg5[%c1_16, %c0_17, %c0_18] : memref<10x1x128xf32, #tpu.memory_space<vmem>>, vector<1x1x128xf32>
    %27 = vector.shape_cast %26 : vector<1x1x128xf32> to vector<1x128xf32>
    %28 = vector.broadcast %27 : vector<1x128xf32> to vector<128x128xf32>
    %29 = arith.addf %25, %28 : vector<128x128xf32>
    %cst_19 = arith.constant 0.000000e+00 : f32
    %30 = vector.broadcast %cst_19 : f32 to vector<128x128xf32>
    %31 = arith.maximumf %29, %30 : vector<128x128xf32>
    %32 = arith.truncf %31 : vector<128x128xf32> to vector<128x128xbf16>
    %c2 = arith.constant 2 : index
    %c0_20 = arith.constant 0 : index
    %c0_21 = arith.constant 0 : index
    %33 = vector.load %arg4[%c2, %c0_20, %c0_21] : memref<10x128x128xbf16, #tpu.memory_space<vmem>>, vector<1x128x128xbf16>
    %34 = vector.shape_cast %33 : vector<1x128x128xbf16> to vector<128x128xbf16>
    %cst_22 = arith.constant dense<0.000000e+00> : vector<128x128xf32>
    %35 = tpu.matmul %32, %34, %cst_22 {dimension_numbers = #tpu.dot_dimension_numbers<[1], [0], [0], [1], [0, 0, 1, 1], [], []>} : vector<128x128xbf16>, vector<128x128xbf16>, vector<128x128xf32> -> vector<128x128xf32>
    %c2_23 = arith.constant 2 : index
    %c0_24 = arith.constant 0 : index
    %c0_25 = arith.constant 0 : index
    %36 = vector.load %arg5[%c2_23, %c0_24, %c0_25] : memref<10x1x128xf32, #tpu.memory_space<vmem>>, vector<1x1x128xf32>
    %37 = vector.shape_cast %36 : vector<1x1x128xf32> to vector<1x128xf32>
    %38 = vector.broadcast %37 : vector<1x128xf32> to vector<128x128xf32>
    %39 = arith.addf %35, %38 : vector<128x128xf32>
    %cst_26 = arith.constant 0.000000e+00 : f32
    %40 = vector.broadcast %cst_26 : f32 to vector<128x128xf32>
    %41 = arith.maximumf %39, %40 : vector<128x128xf32>
    %42 = arith.truncf %41 : vector<128x128xf32> to vector<128x128xbf16>
    %c3 = arith.constant 3 : index
    %c0_27 = arith.constant 0 : index
    %c0_28 = arith.constant 0 : index
    %43 = vector.load %arg4[%c3, %c0_27, %c0_28] : memref<10x128x128xbf16, #tpu.memory_space<vmem>>, vector<1x128x128xbf16>
    %44 = vector.shape_cast %43 : vector<1x128x128xbf16> to vector<128x128xbf16>
    %cst_29 = arith.constant dense<0.000000e+00> : vector<128x128xf32>
    %45 = tpu.matmul %42, %44, %cst_29 {dimension_numbers = #tpu.dot_dimension_numbers<[1], [0], [0], [1], [0, 0, 1, 1], [], []>} : vector<128x128xbf16>, vector<128x128xbf16>, vector<128x128xf32> -> vector<128x128xf32>
    %c3_30 = arith.constant 3 : index
    %c0_31 = arith.constant 0 : index
    %c0_32 = arith.constant 0 : index
    %46 = vector.load %arg5[%c3_30, %c0_31, %c0_32] : memref<10x1x128xf32, #tpu.memory_space<vmem>>, vector<1x1x128xf32>
    %47 = vector.shape_cast %46 : vector<1x1x128xf32> to vector<1x128xf32>
    %48 = vector.broadcast %47 : vector<1x128xf32> to vector<128x128xf32>
    %49 = arith.addf %45, %48 : vector<128x128xf32>
    %cst_33 = arith.constant 0.000000e+00 : f32
    %50 = vector.broadcast %cst_33 : f32 to vector<128x128xf32>
    %51 = arith.maximumf %49, %50 : vector<128x128xf32>
    %52 = arith.truncf %51 : vector<128x128xf32> to vector<128x128xbf16>
    %c4 = arith.constant 4 : index
    %c0_34 = arith.constant 0 : index
    %c0_35 = arith.constant 0 : index
    %53 = vector.load %arg4[%c4, %c0_34, %c0_35] : memref<10x128x128xbf16, #tpu.memory_space<vmem>>, vector<1x128x128xbf16>
    %54 = vector.shape_cast %53 : vector<1x128x128xbf16> to vector<128x128xbf16>
    %cst_36 = arith.constant dense<0.000000e+00> : vector<128x128xf32>
    %55 = tpu.matmul %52, %54, %cst_36 {dimension_numbers = #tpu.dot_dimension_numbers<[1], [0], [0], [1], [0, 0, 1, 1], [], []>} : vector<128x128xbf16>, vector<128x128xbf16>, vector<128x128xf32> -> vector<128x128xf32>
    %c4_37 = arith.constant 4 : index
    %c0_38 = arith.constant 0 : index
    %c0_39 = arith.constant 0 : index
    %56 = vector.load %arg5[%c4_37, %c0_38, %c0_39] : memref<10x1x128xf32, #tpu.memory_space<vmem>>, vector<1x1x128xf32>
    %57 = vector.shape_cast %56 : vector<1x1x128xf32> to vector<1x128xf32>
    %58 = vector.broadcast %57 : vector<1x128xf32> to vector<128x128xf32>
    %59 = arith.addf %55, %58 : vector<128x128xf32>
    %cst_40 = arith.constant 0.000000e+00 : f32
    %60 = vector.broadcast %cst_40 : f32 to vector<128x128xf32>
    %61 = arith.maximumf %59, %60 : vector<128x128xf32>
    %62 = arith.truncf %61 : vector<128x128xf32> to vector<128x128xbf16>
    %c5 = arith.constant 5 : index
    %c0_41 = arith.constant 0 : index
    %c0_42 = arith.constant 0 : index
    %63 = vector.load %arg4[%c5, %c0_41, %c0_42] : memref<10x128x128xbf16, #tpu.memory_space<vmem>>, vector<1x128x128xbf16>
    %64 = vector.shape_cast %63 : vector<1x128x128xbf16> to vector<128x128xbf16>
    %cst_43 = arith.constant dense<0.000000e+00> : vector<128x128xf32>
    %65 = tpu.matmul %62, %64, %cst_43 {dimension_numbers = #tpu.dot_dimension_numbers<[1], [0], [0], [1], [0, 0, 1, 1], [], []>} : vector<128x128xbf16>, vector<128x128xbf16>, vector<128x128xf32> -> vector<128x128xf32>
    %c5_44 = arith.constant 5 : index
    %c0_45 = arith.constant 0 : index
    %c0_46 = arith.constant 0 : index
    %66 = vector.load %arg5[%c5_44, %c0_45, %c0_46] : memref<10x1x128xf32, #tpu.memory_space<vmem>>, vector<1x1x128xf32>
    %67 = vector.shape_cast %66 : vector<1x1x128xf32> to vector<1x128xf32>
    %68 = vector.broadcast %67 : vector<1x128xf32> to vector<128x128xf32>
    %69 = arith.addf %65, %68 : vector<128x128xf32>
    %cst_47 = arith.constant 0.000000e+00 : f32
    %70 = vector.broadcast %cst_47 : f32 to vector<128x128xf32>
    %71 = arith.maximumf %69, %70 : vector<128x128xf32>
    %72 = arith.truncf %71 : vector<128x128xf32> to vector<128x128xbf16>
    %c6 = arith.constant 6 : index
    %c0_48 = arith.constant 0 : index
    %c0_49 = arith.constant 0 : index
    %73 = vector.load %arg4[%c6, %c0_48, %c0_49] : memref<10x128x128xbf16, #tpu.memory_space<vmem>>, vector<1x128x128xbf16>
    %74 = vector.shape_cast %73 : vector<1x128x128xbf16> to vector<128x128xbf16>
    %cst_50 = arith.constant dense<0.000000e+00> : vector<128x128xf32>
    %75 = tpu.matmul %72, %74, %cst_50 {dimension_numbers = #tpu.dot_dimension_numbers<[1], [0], [0], [1], [0, 0, 1, 1], [], []>} : vector<128x128xbf16>, vector<128x128xbf16>, vector<128x128xf32> -> vector<128x128xf32>
    %c6_51 = arith.constant 6 : index
    %c0_52 = arith.constant 0 : index
    %c0_53 = arith.constant 0 : index
    %76 = vector.load %arg5[%c6_51, %c0_52, %c0_53] : memref<10x1x128xf32, #tpu.memory_space<vmem>>, vector<1x1x128xf32>
    %77 = vector.shape_cast %76 : vector<1x1x128xf32> to vector<1x128xf32>
    %78 = vector.broadcast %77 : vector<1x128xf32> to vector<128x128xf32>
    %79 = arith.addf %75, %78 : vector<128x128xf32>
    %cst_54 = arith.constant 0.000000e+00 : f32
    %80 = vector.broadcast %cst_54 : f32 to vector<128x128xf32>
    %81 = arith.maximumf %79, %80 : vector<128x128xf32>
    %82 = arith.truncf %81 : vector<128x128xf32> to vector<128x128xbf16>
    %c7 = arith.constant 7 : index
    %c0_55 = arith.constant 0 : index
    %c0_56 = arith.constant 0 : index
    %83 = vector.load %arg4[%c7, %c0_55, %c0_56] : memref<10x128x128xbf16, #tpu.memory_space<vmem>>, vector<1x128x128xbf16>
    %84 = vector.shape_cast %83 : vector<1x128x128xbf16> to vector<128x128xbf16>
    %cst_57 = arith.constant dense<0.000000e+00> : vector<128x128xf32>
    %85 = tpu.matmul %82, %84, %cst_57 {dimension_numbers = #tpu.dot_dimension_numbers<[1], [0], [0], [1], [0, 0, 1, 1], [], []>} : vector<128x128xbf16>, vector<128x128xbf16>, vector<128x128xf32> -> vector<128x128xf32>
    %c7_58 = arith.constant 7 : index
    %c0_59 = arith.constant 0 : index
    %c0_60 = arith.constant 0 : index
    %86 = vector.load %arg5[%c7_58, %c0_59, %c0_60] : memref<10x1x128xf32, #tpu.memory_space<vmem>>, vector<1x1x128xf32>
    %87 = vector.shape_cast %86 : vector<1x1x128xf32> to vector<1x128xf32>
    %88 = vector.broadcast %87 : vector<1x128xf32> to vector<128x128xf32>
    %89 = arith.addf %85, %88 : vector<128x128xf32>
    %cst_61 = arith.constant 0.000000e+00 : f32
    %90 = vector.broadcast %cst_61 : f32 to vector<128x128xf32>
    %91 = arith.maximumf %89, %90 : vector<128x128xf32>
    %92 = arith.truncf %91 : vector<128x128xf32> to vector<128x128xbf16>
    %c8 = arith.constant 8 : index
    %c0_62 = arith.constant 0 : index
    %c0_63 = arith.constant 0 : index
    %93 = vector.load %arg4[%c8, %c0_62, %c0_63] : memref<10x128x128xbf16, #tpu.memory_space<vmem>>, vector<1x128x128xbf16>
    %94 = vector.shape_cast %93 : vector<1x128x128xbf16> to vector<128x128xbf16>
    %cst_64 = arith.constant dense<0.000000e+00> : vector<128x128xf32>
    %95 = tpu.matmul %92, %94, %cst_64 {dimension_numbers = #tpu.dot_dimension_numbers<[1], [0], [0], [1], [0, 0, 1, 1], [], []>} : vector<128x128xbf16>, vector<128x128xbf16>, vector<128x128xf32> -> vector<128x128xf32>
    %c8_65 = arith.constant 8 : index
    %c0_66 = arith.constant 0 : index
    %c0_67 = arith.constant 0 : index
    %96 = vector.load %arg5[%c8_65, %c0_66, %c0_67] : memref<10x1x128xf32, #tpu.memory_space<vmem>>, vector<1x1x128xf32>
    %97 = vector.shape_cast %96 : vector<1x1x128xf32> to vector<1x128xf32>
    %98 = vector.broadcast %97 : vector<1x128xf32> to vector<128x128xf32>
    %99 = arith.addf %95, %98 : vector<128x128xf32>
    %cst_68 = arith.constant 0.000000e+00 : f32
    %100 = vector.broadcast %cst_68 : f32 to vector<128x128xf32>
    %101 = arith.maximumf %99, %100 : vector<128x128xf32>
    %102 = arith.truncf %101 : vector<128x128xf32> to vector<128x128xbf16>
    %c9 = arith.constant 9 : index
    %c0_69 = arith.constant 0 : index
    %c0_70 = arith.constant 0 : index
    %103 = vector.load %arg4[%c9, %c0_69, %c0_70] : memref<10x128x128xbf16, #tpu.memory_space<vmem>>, vector<1x128x128xbf16>
    %104 = vector.shape_cast %103 : vector<1x128x128xbf16> to vector<128x128xbf16>
    %cst_71 = arith.constant dense<0.000000e+00> : vector<128x128xf32>
    %105 = tpu.matmul %102, %104, %cst_71 {dimension_numbers = #tpu.dot_dimension_numbers<[1], [0], [0], [1], [0, 0, 1, 1], [], []>} : vector<128x128xbf16>, vector<128x128xbf16>, vector<128x128xf32> -> vector<128x128xf32>
    %c9_72 = arith.constant 9 : index
    %c0_73 = arith.constant 0 : index
    %c0_74 = arith.constant 0 : index
    %106 = vector.load %arg5[%c9_72, %c0_73, %c0_74] : memref<10x1x128xf32, #tpu.memory_space<vmem>>, vector<1x1x128xf32>
    %107 = vector.shape_cast %106 : vector<1x1x128xf32> to vector<1x128xf32>
    %108 = vector.broadcast %107 : vector<1x128xf32> to vector<128x128xf32>
    %109 = arith.addf %105, %108 : vector<128x128xf32>
    %cst_75 = arith.constant 0.000000e+00 : f32
    %110 = vector.broadcast %cst_75 : f32 to vector<128x128xf32>
    %111 = arith.maximumf %109, %110 : vector<128x128xf32>
    %112 = arith.truncf %111 : vector<128x128xf32> to vector<128x128xbf16>
    %c0_76 = arith.constant 0 : index
    %c0_77 = arith.constant 0 : index
    %113 = vector.load %arg6[%c0_76, %c0_77] : memref<128x128xbf16, #tpu.memory_space<vmem>>, vector<128x128xbf16>
    %cst_78 = arith.constant dense<0.000000e+00> : vector<128x128xf32>
    %114 = tpu.matmul %112, %113, %cst_78 {dimension_numbers = #tpu.dot_dimension_numbers<[1], [0], [0], [1], [0, 0, 1, 1], [], []>} : vector<128x128xbf16>, vector<128x128xbf16>, vector<128x128xf32> -> vector<128x128xf32>
    %c0_79 = arith.constant 0 : index
    %c0_80 = arith.constant 0 : index
    %115 = vector.load %arg7[%c0_79, %c0_80] : memref<1x128xf32, #tpu.memory_space<vmem>>, vector<1x128xf32>
    %116 = vector.broadcast %115 : vector<1x128xf32> to vector<128x128xf32>
    %117 = arith.addf %114, %116 : vector<128x128xf32>
    %118 = arith.index_cast %1 : i32 to index
    %c0_81 = arith.constant 0 : index
    %119 = vector.load %arg8[%118, %c0_81] : memref<128x128xf32, #tpu.memory_space<vmem>>, vector<128x128xf32>
    tpu.vector_store %arg8[%118, %c0_81], %117 {strides = array<i32>} : memref<128x128xf32, #tpu.memory_space<vmem>>, vector<128x128xf32>,
    %c1_i32 = arith.constant 1 : i32
    return
  }
  func.func @transform_0(%arg0: i32) -> (i32, i32) {
    %c0_i32 = arith.constant 0 : i32
    %c0_i32_0 = arith.constant 0 : i32
    return %arg0, %c0_i32 : i32, i32
  }
  func.func @transform_1(%arg0: i32) -> (i32, i32) {
    %c0_i32 = arith.constant 0 : i32
    %c0_i32_0 = arith.constant 0 : i32
    %c0_i32_1 = arith.constant 0 : i32
    return %c0_i32, %c0_i32_0 : i32, i32
  }
  func.func @transform_2(%arg0: i32) -> (i32, i32) {
    %c0_i32 = arith.constant 0 : i32
    %c0_i32_0 = arith.constant 0 : i32
    %c0_i32_1 = arith.constant 0 : i32
    return %c0_i32, %c0_i32_0 : i32, i32
  }
  func.func @transform_3(%arg0: i32) -> (i32, i32, i32) {
    %c0_i32 = arith.constant 0 : i32
    %c0_i32_0 = arith.constant 0 : i32
    %c0_i32_1 = arith.constant 0 : i32
    %c0_i32_2 = arith.constant 0 : i32
    return %c0_i32, %c0_i32_0, %c0_i32_1 : i32, i32, i32
  }
  func.func @transform_4(%arg0: i32) -> (i32, i32, i32) {
    %c0_i32 = arith.constant 0 : i32
    %c0_i32_0 = arith.constant 0 : i32
    %c0_i32_1 = arith.constant 0 : i32
    %c0_i32_2 = arith.constant 0 : i32
    return %c0_i32, %c0_i32_0, %c0_i32_1 : i32, i32, i32
  }
  func.func @transform_5(%arg0: i32) -> (i32, i32) {
    %c0_i32 = arith.constant 0 : i32
    %c0_i32_0 = arith.constant 0 : i32
    %c0_i32_1 = arith.constant 0 : i32
    return %c0_i32, %c0_i32_0 : i32, i32
  }
  func.func @transform_6(%arg0: i32) -> (i32, i32) {
    %c0_i32 = arith.constant 0 : i32
    %c0_i32_0 = arith.constant 0 : i32
    %c0_i32_1 = arith.constant 0 : i32
    return %c0_i32, %c0_i32_0 : i32, i32
  }
  func.func @transform_7(%arg0: i32) -> (i32, i32) {
    %c0_i32 = arith.constant 0 : i32
    %c0_i32_0 = arith.constant 0 : i32
    return %arg0, %c0_i32 : i32, i32
  }
}

</mosaic_0001>

<llo_original>
// kernel: tpu_custom_call.1
$region0: #{tpu_custom_call.1}
  #allocation0 [shape = 'u32[]', space=smem, size = 0x4, offset = 0x4, fixed_abs, tag = 'smem constant byte address 0x4 - core index']
  #allocation1 [shape = 'u32[144,128]{1,0:T(1,128)}', space=vmem, size = 0x12000, scoped, tag = 'internal scratch']
  %s0 = inlined_call_operand.vmem [shape: f32[256,16], index: 0, kind: input, shape index: {}]
  %s1 = inlined_call_operand.vmem [shape: bf16[16,128], index: 1, kind: input, shape index: {}]
  %s2 = inlined_call_operand.vmem [shape: f32[1,128], index: 2, kind: input, shape index: {}]
  %s3 = inlined_call_operand.hbm [shape: bf16[10,128,128], index: 3, kind: input, shape index: {}]
  %s4 = inlined_call_operand.vmem [shape: f32[10,1,128], index: 4, kind: input, shape index: {}]
  %s5 = inlined_call_operand.vmem [shape: bf16[128,128], index: 5, kind: input, shape index: {}]
  %s6 = inlined_call_operand.vmem [shape: f32[1,128], index: 6, kind: input, shape index: {}]
  %s7 = inlined_call_operand.hbm [shape: f32[256,128], index: 7, kind: output, shape index: {}]
  %s8 = sld [smem:[#allocation0]]
  $region65: #{tpu_custom_call.1} parent=0
    _
  %s10 = ssub.s32 1, %s8
  %s11 = scalar_select 0, %s10, %s8
  $region1: #{tpu_custom_call.1} parent=0
    #allocation2 [shape = 'u8[327680]{0}', space=vmem, size = 0x50000, scoped, tag = 'input window, operand 3, single buffered']
    #allocation3 [shape = 's32[2]{0}', space=sflag, size = 0x8, scoped, tag = 'scoped memory for tpu_custom_call.1']
    #allocation4 [shape = 's32[2]{0}', space=sflag, size = 0x8, scoped, tag = 'scoped memory for tpu_custom_call.1']
    #allocation5 [shape = 'u8[131072]{0}', space=vmem, size = 0x20000, scoped, tag = 'output window, operand 0']
    %12 = vsyncpa [#allocation3], 0
    %13 = vsyncpa [#allocation4], 0
    %s14 = scalar_lea.sflag [#allocation4], 1
    %15 = vsyncpa %s14, 0
    loop: start=0, step=1, limit=4
    $region2: #{tpu_custom_call.1} parent=1 // loop_pre_header
      _
    $region3: #{tpu_custom_call.1} parent=1 // loop_header
      %s17 = sphi 0, %s21
      %p18 = scmp.ge.s32.totalorder %s17, 4
      %s27 = sphi 0, %s29
      %s30 = sphi 0, %s27
      %s31 = sphi 0, %s30
      %s47 = sphi 0, %s31
      %s51 = sphi 0, %s51
      %s53 = sphi 0, %s51
      %s54 = sphi 0, %s53
      %s68 = sphi 0, %s54
      %s72 = sphi 0, %s72
      %s74 = sphi 0, %s72
      %s75 = sphi 0, %s74
      %s89 = sphi 0, %s75
      %s93 = sphi 0, %s93
      %s95 = sphi 0, %s93
      %s96 = sphi 0, %s95
      %s110 = sphi 0, %s96
      %s114 = sphi 0, %s114
      %s116 = sphi 0, %s114
      %s117 = sphi 0, %s116
      %s131 = sphi 0, %s117
      %s135 = sphi 0, %s135
      %s137 = sphi 0, %s135
      %s138 = sphi 0, %s137
      %s152 = sphi 0, %s138
      %s156 = sphi 0, %s156
      %s158 = sphi 0, %s156
      %s159 = sphi 0, %s158
      %s173 = sphi 0, %s159
      %s179 = sphi 0, %s181
      %s182 = sphi 0, %s179
      %s183 = sphi 0, %s182
      %s199 = sphi 0, %s183
    $region4: #{tpu_custom_call.1} parent=1 // loop_header_branch
      %20 = sbr.rel (%p18) target = $region8
    $region5: #{tpu_custom_call.1} parent=1 // loop_body
      %s22 = ssub.s32 %s17, 1
      %s23 = ssub.s32 %s17, 2
      %s24 = sadd.s32 %s17, 1
      %s25 = ssub.s32 %s17, %s24
      %p26 = scmp.eq.s32.totalorder %s25, 0
      %s28 = sadd.s32 %s27, 1
      %s29 = scalar_select %p26, %s27, %s28
      %p32 = pneg %p26
      %p33 = scmp.eq.s32.totalorder %s17, 1
      %p34 = por %p32, %p33
      %p35 = scmp.ne.s32.totalorder %s27, %s30
      %p36 = scmp.eq.s32.totalorder %s17, 0
      %p37 = por %p35, %p36
      %p38 = scmp.ne.s32.totalorder %s27, %s30
      %p39 = scmp.eq.s32.totalorder %s22, 1
      %p40 = por %p38, %p39
      %p41 = scmp.ne.s32.totalorder %s30, %s31
      %p42 = scmp.eq.s32.totalorder %s22, 0
      %p43 = por %p41, %p42
      %p44 = scmp.ne.s32.totalorder %s30, %s31
      %p45 = scmp.eq.s32.totalorder %s23, 1
      %p46 = por %p44, %p45
      %p48 = scmp.ne.s32.totalorder %s31, %s47
      %p49 = scmp.eq.s32.totalorder %s23, 0
      %p50 = por %p48, %p49
      %s52 = sadd.s32 %s51, 1
      %p55 = scmp.eq.s32.totalorder %s17, 1
      %p56 = scmp.ne.s32.totalorder %s51, %s53
      %p57 = scmp.eq.s32.totalorder %s17, 0
      %p58 = por %p56, %p57
      %p59 = scmp.ne.s32.totalorder %s51, %s53
      %p60 = scmp.eq.s32.totalorder %s22, 1
      %p61 = por %p59, %p60
      %p62 = scmp.ne.s32.totalorder %s53, %s54
      %p63 = scmp.eq.s32.totalorder %s22, 0
      %p64 = por %p62, %p63
      %p65 = scmp.ne.s32.totalorder %s53, %s54
      %p66 = scmp.eq.s32.totalorder %s23, 1
      %p67 = por %p65, %p66
      %p69 = scmp.ne.s32.totalorder %s54, %s68
      %p70 = scmp.eq.s32.totalorder %s23, 0
      %p71 = por %p69, %p70
      %s73 = sadd.s32 %s72, 1
      %p76 = scmp.eq.s32.totalorder %s17, 1
      %p77 = scmp.ne.s32.totalorder %s72, %s74
      %p78 = scmp.eq.s32.totalorder %s17, 0
      %p79 = por %p77, %p78
      %p80 = scmp.ne.s32.totalorder %s72, %s74
      %p81 = scmp.eq.s32.totalorder %s22, 1
      %p82 = por %p80, %p81
      %p83 = scmp.ne.s32.totalorder %s74, %s75
      %p84 = scmp.eq.s32.totalorder %s22, 0
      %p85 = por %p83, %p84
      %p86 = scmp.ne.s32.totalorder %s74, %s75
      %p87 = scmp.eq.s32.totalorder %s23, 1
      %p88 = por %p86, %p87
      %p90 = scmp.ne.s32.totalorder %s75, %s89
      %p91 = scmp.eq.s32.totalorder %s23, 0
      %p92 = por %p90, %p91
      %s94 = sadd.s32 %s93, 1
      %p97 = scmp.eq.s32.totalorder %s17, 1
      %p98 = scmp.ne.s32.totalorder %s93, %s95
      %p99 = scmp.eq.s32.totalorder %s17, 0
      %p100 = por %p98, %p99
      %p101 = scmp.ne.s32.totalorder %s93, %s95
      %p102 = scmp.eq.s32.totalorder %s22, 1
      %p103 = por %p101, %p102
      %p104 = scmp.ne.s32.totalorder %s95, %s96
      %p105 = scmp.eq.s32.totalorder %s22, 0
      %p106 = por %p104, %p105
      %p107 = scmp.ne.s32.totalorder %s95, %s96
      %p108 = scmp.eq.s32.totalorder %s23, 1
      %p109 = por %p107, %p108
      %p111 = scmp.ne.s32.totalorder %s96, %s110
      %p112 = scmp.eq.s32.totalorder %s23, 0
      %p113 = por %p111, %p112
      %s115 = sadd.s32 %s114, 1
      %p118 = scmp.eq.s32.totalorder %s17, 1
      %p119 = scmp.ne.s32.totalorder %s114, %s116
      %p120 = scmp.eq.s32.totalorder %s17, 0
      %p121 = por %p119, %p120
      %p122 = scmp.ne.s32.totalorder %s114, %s116
      %p123 = scmp.eq.s32.totalorder %s22, 1
      %p124 = por %p122, %p123
      %p125 = scmp.ne.s32.totalorder %s116, %s117
      %p126 = scmp.eq.s32.totalorder %s22, 0
      %p127 = por %p125, %p126
      %p128 = scmp.ne.s32.totalorder %s116, %s117
      %p129 = scmp.eq.s32.totalorder %s23, 1
      %p130 = por %p128, %p129
      %p132 = scmp.ne.s32.totalorder %s117, %s131
      %p133 = scmp.eq.s32.totalorder %s23, 0
      %p134 = por %p132, %p133
      %s136 = sadd.s32 %s135, 1
      %p139 = scmp.eq.s32.totalorder %s17, 1
      %p140 = scmp.ne.s32.totalorder %s135, %s137
      %p141 = scmp.eq.s32.totalorder %s17, 0
      %p142 = por %p140, %p141
      %p143 = scmp.ne.s32.totalorder %s135, %s137
      %p144 = scmp.eq.s32.totalorder %s22, 1
      %p145 = por %p143, %p144
      %p146 = scmp.ne.s32.totalorder %s137, %s138
      %p147 = scmp.eq.s32.totalorder %s22, 0
      %p148 = por %p146, %p147
      %p149 = scmp.ne.s32.totalorder %s137, %s138
      %p150 = scmp.eq.s32.totalorder %s23, 1
      %p151 = por %p149, %p150
      %p153 = scmp.ne.s32.totalorder %s138, %s152
      %p154 = scmp.eq.s32.totalorder %s23, 0
      %p155 = por %p153, %p154
      %s157 = sadd.s32 %s156, 1
      %p160 = scmp.eq.s32.totalorder %s17, 1
      %p161 = scmp.ne.s32.totalorder %s156, %s158
      %p162 = scmp.eq.s32.totalorder %s17, 0
      %p163 = por %p161, %p162
      %p164 = scmp.ne.s32.totalorder %s156, %s158
      %p165 = scmp.eq.s32.totalorder %s22, 1
      %p166 = por %p164, %p165
      %p167 = scmp.ne.s32.totalorder %s158, %s159
      %p168 = scmp.eq.s32.totalorder %s22, 0
      %p169 = por %p167, %p168
      %p170 = scmp.ne.s32.totalorder %s158, %s159
      %p171 = scmp.eq.s32.totalorder %s23, 1
      %p172 = por %p170, %p171
      %p174 = scmp.ne.s32.totalorder %s159, %s173
      %p175 = scmp.eq.s32.totalorder %s23, 0
      %p176 = por %p174, %p175
      %s177 = ssub.s32 %s17, %s24
      %p178 = scmp.eq.s32.totalorder %s177, 0
      %s180 = sadd.s32 %s179, 1
      %s181 = scalar_select %p178, %s179, %s180
      %p184 = pneg %p178
      %p185 = scmp.eq.s32.totalorder %s17, 1
      %p186 = por %p184, %p185
      %p187 = scmp.ne.s32.totalorder %s179, %s182
      %p188 = scmp.eq.s32.totalorder %s17, 0
      %p189 = por %p187, %p188
      %p190 = scmp.ne.s32.totalorder %s179, %s182
      %p191 = scmp.eq.s32.totalorder %s22, 1
      %p192 = por %p190, %p191
      %p193 = scmp.ne.s32.totalorder %s182, %s183
      %p194 = scmp.eq.s32.totalorder %s22, 0
      %p195 = por %p193, %p194
      %p196 = scmp.ne.s32.totalorder %s182, %s183
      %p197 = scmp.eq.s32.totalorder %s23, 1
      %p198 = por %p196, %p197
      %p200 = scmp.ne.s32.totalorder %s183, %s199
      %p201 = scmp.eq.s32.totalorder %s23, 0
      %p202 = por %p200, %p201
      %p203 = scmp.le.s32.totalorder 1, %s17
      %p204 = scmp.lt.s32.totalorder %s17, 3
      %p205 = pnand %p203, %p204
      %p206 = pneg %p205
      // Predicated region
      $region9: #{tpu_custom_call.1} parent=5 // pred_check
        _
      $region10: #{tpu_custom_call.1} parent=5 // pred_check_branch
        %208 = sbr.rel (%p205) target = $region12
      $region11: #{tpu_custom_call.1} parent=5 // pred_region
        %s209 = ssub.s32 %s17, 1
        // Predicated region
        $region13: #{tpu_custom_call.1} parent=11 // pred_check
          %p210 = pneg %p64
        $region14: #{tpu_custom_call.1} parent=11 // pred_check_branch
          %212 = sbr.rel (%p210) target = $region16
        $region15: #{tpu_custom_call.1} parent=11 // pred_region
          _
        $region16: #{tpu_custom_call.1} parent=11 // pred_fallthru
          _
        // Predicated region
        $region17: #{tpu_custom_call.1} parent=11 // pred_check
          %p213 = pneg %p85
        $region18: #{tpu_custom_call.1} parent=11 // pred_check_branch
          %215 = sbr.rel (%p213) target = $region20
        $region19: #{tpu_custom_call.1} parent=11 // pred_region
          _
        $region20: #{tpu_custom_call.1} parent=11 // pred_fallthru
          _
        // Predicated region
        $region21: #{tpu_custom_call.1} parent=11 // pred_check
          %p216 = pneg %p106
        $region22: #{tpu_custom_call.1} parent=11 // pred_check_branch
          %218 = sbr.rel (%p216) target = $region24
        $region23: #{tpu_custom_call.1} parent=11 // pred_region
          %s220 = ssub.s32 10240, 10240
          %221 = vsyncadd [#allocation3], %s220
          %s222 = sshll.u32 [#allocation2], 4
          %s223 = int_to_ptr.vmem [resolvable:$true] %s222
          %228 = dma.hbm_to_vmem [thread:$0]  %s3, 10240, %s223, [#allocation3], 64, 64, 4
        $region24: #{tpu_custom_call.1} parent=11 // pred_fallthru
          _
        // Predicated region
        $region25: #{tpu_custom_call.1} parent=11 // pred_check
          %p229 = pneg %p127
        $region26: #{tpu_custom_call.1} parent=11 // pred_check_branch
          %231 = sbr.rel (%p229) target = $region28
        $region27: #{tpu_custom_call.1} parent=11 // pred_region
          _
        $region28: #{tpu_custom_call.1} parent=11 // pred_fallthru
          _
        // Predicated region
        $region29: #{tpu_custom_call.1} parent=11 // pred_check
          %p232 = pneg %p148
        $region30: #{tpu_custom_call.1} parent=11 // pred_check_branch
          %234 = sbr.rel (%p232) target = $region32
        $region31: #{tpu_custom_call.1} parent=11 // pred_region
          _
        $region32: #{tpu_custom_call.1} parent=11 // pred_fallthru
          _
        // Predicated region
        $region33: #{tpu_custom_call.1} parent=11 // pred_check
          %p235 = pneg %p169
        $region34: #{tpu_custom_call.1} parent=11 // pred_check_branch
          %237 = sbr.rel (%p235) target = $region36
        $region35: #{tpu_custom_call.1} parent=11 // pred_region
          _
        $region36: #{tpu_custom_call.1} parent=11 // pred_fallthru
          _
      $region12: #{tpu_custom_call.1} parent=5 // pred_fallthru
        _
      %p238 = scmp.lt.s32.totalorder %s17, 2
      // Predicated region
      $region37: #{tpu_custom_call.1} parent=5 // pred_check
        %p239 = pneg %p238
      $region38: #{tpu_custom_call.1} parent=5 // pred_check_branch
        %241 = sbr.rel (%p239) target = $region40
      $region39: #{tpu_custom_call.1} parent=5 // pred_region
        // Predicated region
        $region41: #{tpu_custom_call.1} parent=39 // pred_check
          %p242 = pneg %p37
        $region42: #{tpu_custom_call.1} parent=39 // pred_check_branch
          %244 = sbr.rel (%p242) target = $region44
        $region43: #{tpu_custom_call.1} parent=39 // pred_region
          %s245 = smul.u32 16, %s17
          %p246 = scmp.lt.s32.totalorder %s245, 31
          %s247 = scalar_select %p246, %s245, 31
          %s248 = smul.addr %s247, 8
          %s249 = scalar_lea.vmem %s0, %s248
          %s250 = smul.u32 16, %s17
        $region44: #{tpu_custom_call.1} parent=39 // pred_fallthru
          _
      $region40: #{tpu_custom_call.1} parent=5 // pred_fallthru
        _
      %p251 = scmp.le.s32.totalorder 1, %s17
      %p252 = scmp.lt.s32.totalorder %s17, 3
      %p253 = pnand %p251, %p252
      %p254 = pneg %p253
      // Predicated region
      $region45: #{tpu_custom_call.1} parent=5 // pred_check
        _
      $region46: #{tpu_custom_call.1} parent=5 // pred_check_branch
        %256 = sbr.rel (%p253) target = $region48
      $region47: #{tpu_custom_call.1} parent=5 // pred_region
        %s257 = ssub.s32 %s17, 1
        // Predicated region
        $region49: #{tpu_custom_call.1} parent=47 // pred_check
          %p258 = pneg %p106
        $region50: #{tpu_custom_call.1} parent=47 // pred_check_branch
          %260 = sbr.rel (%p258) target = $region52
        $region51: #{tpu_custom_call.1} parent=47 // pred_region
          %261 = dma.done [#allocation3], 10240
        $region52: #{tpu_custom_call.1} parent=47 // pred_fallthru
          _
        %s262 = smul.u32 16, %s22
        %p263 = scmp.lt.s32.totalorder %s262, 31
        %s264 = scalar_select %p263, %s262, 31
        %s265 = smul.addr %s264, 8
        %s266 = scalar_lea.vmem %s0, %s265
        %p267 = pneg %p43
        %p268 = pneg %p40
        %p269 = pneg %p64
        %p270 = pneg %p61
        %p271 = pneg %p85
        %p272 = pneg %p82
        %p273 = pneg %p106
        %p274 = pneg %p103
        %p275 = pneg %p127
        %p276 = pneg %p124
        %p277 = pneg %p148
        %p278 = pneg %p145
        %p279 = pneg %p169
        %p280 = pneg %p166
        %p281 = pneg %p195
        %p282 = pneg %p192
        %s283 = sand.u32 %s182, 1
        %s284 = scalar_lea.sflag [#allocation4], %s283
        %s285 = sand.u32 %s182, 1
        %s286 = smul.addr %s285, 128
        %s287 = scalar_lea.vmem [#allocation5], %s286
        %s288 = smul.u32 16, %s22
        %p289 = scmp.lt.s32.totalorder %s288, 31
        %s290 = scalar_select %p289, %s288, 31
        %s291 = smul.addr %s290, 8
        %s292 = scalar_lea.vmem %s0, %s291
        %s293 = smul.u32 16, %s22
        %s294 = smul.u32 16, %s22
        %v296 = vld [vmem:[%s292] sm:$0xff]
        %v297 = vld [vmem:[%s292 + $0x8] sm:$0xff]
        %v298 = vld [vmem:[%s292 + $0x10] sm:$0xff]
        %v299 = vld [vmem:[%s292 + $0x18] sm:$0xff]
        %v300 = vld [vmem:[%s292 + $0x20] sm:$0xff]
        %v301 = vld [vmem:[%s292 + $0x28] sm:$0xff]
        %v302 = vld [vmem:[%s292 + $0x30] sm:$0xff]
        %v303 = vld [vmem:[%s292 + $0x38] sm:$0xff]
        %v304 = vld [vmem:[%s292 + $0x40] sm:$0xff]
        %v305 = vld [vmem:[%s292 + $0x48] sm:$0xff]
        %v306 = vld [vmem:[%s292 + $0x50] sm:$0xff]
        %v307 = vld [vmem:[%s292 + $0x58] sm:$0xff]
        %v308 = vld [vmem:[%s292 + $0x60] sm:$0xff]
        %v309 = vld [vmem:[%s292 + $0x68] sm:$0xff]
        %v310 = vld [vmem:[%s292 + $0x70] sm:$0xff]
        %v311 = vld [vmem:[%s292 + $0x78] sm:$0xff]
        %v312 = vpack.c.bf16 %v297, %v296
        %v313 = vpack.c.bf16 %v299, %v298
        %v314 = vpack.c.bf16 %v301, %v300
        %v315 = vpack.c.bf16 %v303, %v302
        %v316 = vpack.c.bf16 %v305, %v304
        %v317 = vpack.c.bf16 %v307, %v306
        %v318 = vpack.c.bf16 %v309, %v308
        %v319 = vpack.c.bf16 %v311, %v310
        %v320 = vld [vmem:[%s1] sm:$0xf]
        %v321 = vld [vmem:[%s1 + $0x4] sm:$0xf]
        %v322 = vld [vmem:[%s2] sm:$0x1]
        %v324 = vlaneseq
        %v325 = vshrl.u32 %v324, 7
        %v326 = vsub.s32 0, %v325
        %v327 = vrot.slane %v322, %v326
        %v331 = vunpack.c.l.b16 %v320
        %v332 = vunpack.c.l.b16 %v321
        %v333 = vpack.c.b16 %v332, %v331
        %vm335 = vcmask 130048
        %v337 = vsel %vm335, %v312, 0
        %v340 = vsel %vm335, %v313, 0
        %v343 = vsel %vm335, %v314, 0
        %v346 = vsel %vm335, %v315, 0
        %v349 = vsel %vm335, %v316, 0
        %v352 = vsel %vm335, %v317, 0
        %v355 = vsel %vm335, %v318, 0
        %v358 = vsel %vm335, %v319, 0
        %360 = vmatprep.subr.bf16.mxu0 0
        %361 = vmatpush1.bf16.msra.mxu0 0
        %362 = vmatprep.subr.bf16.mxu0 0
        %363 = vmatpush1.bf16.msra.mxu0 0
        %364 = vmatprep.subr.bf16.mxu0 0
        %365 = vmatpush1.bf16.msra.mxu0 0
        %366 = vmatprep.subr.bf16.mxu0 0
        %367 = vmatpush1.bf16.msra.mxu0 0
        %368 = vmatprep.subr.bf16.mxu0 0
        %369 = vmatpush1.bf16.msra.mxu0 0
        %370 = vmatprep.subr.bf16.mxu0 0
        %371 = vmatpush1.bf16.msra.mxu0 0
        %372 = vmatprep.subr.bf16.mxu0 0
        %373 = vmatpush1.bf16.msra.mxu0 0
        %374 = vmatprep.subr.bf16.mxu0 0
        %375 = vmatpush1.bf16.msra.mxu0 %v333
        %376 = vmatprep.subr.bf16.mxu0 0
        %377 = vmatpush2.bf16.msra.mxu0 0
        %378 = vmatprep.subr.bf16.mxu0 0
        %379 = vmatpush2.bf16.msra.mxu0 0
        %380 = vmatprep.subr.bf16.mxu0 0
        %381 = vmatpush2.bf16.msra.mxu0 0
        %382 = vmatprep.subr.bf16.mxu0 0
        %383 = vmatpush2.bf16.msra.mxu0 0
        %384 = vmatprep.subr.bf16.mxu0 0
        %385 = vmatpush2.bf16.msra.mxu0 0
        %386 = vmatprep.subr.bf16.mxu0 0
        %387 = vmatpush2.bf16.msra.mxu0 0
        %388 = vmatprep.subr.bf16.mxu0 0
        %389 = vmatpush2.bf16.msra.mxu0 0
        %390 = vmatprep.subr.bf16.mxu0 0
        %391 = vmatpush2.bf16.msra.mxu0 0
        %392 = vmatprep.mubr.bf16.mxu0 0
        %393 = vmatmul.mubr.bf16.gmra.mxu0 %v337
        %v394 = vpop.f32.mrf.mxu0
        %v395 = vadd.f32 %v327, %v394
        %v396 = vpop.f32.mrf.mxu0
        %v397 = vpop.f32.mrf.mxu0
        %v398 = vadd.f32 %v327, %v397
        %v399 = vpop.f32.mrf.mxu0
        %400 = vmatprep.mubr.bf16.mxu0 0
        %401 = vmatmul.mubr.bf16.gmra.mxu0 %v340
        %v402 = vpop.f32.mrf.mxu0
        %v403 = vadd.f32 %v327, %v402
        %v404 = vpop.f32.mrf.mxu0
        %v405 = vpop.f32.mrf.mxu0
        %v406 = vadd.f32 %v327, %v405
        %v407 = vpop.f32.mrf.mxu0
        %408 = vmatprep.mubr.bf16.mxu0 0
        %409 = vmatmul.mubr.bf16.gmra.mxu0 %v343
        %v410 = vpop.f32.mrf.mxu0
        %v411 = vadd.f32 %v327, %v410
        %v412 = vpop.f32.mrf.mxu0
        %v413 = vpop.f32.mrf.mxu0
        %v414 = vadd.f32 %v327, %v413
        %v415 = vpop.f32.mrf.mxu0
        %416 = vmatprep.mubr.bf16.mxu0 0
        %417 = vmatmul.mubr.bf16.gmra.mxu0 %v346
        %v418 = vpop.f32.mrf.mxu0
        %v419 = vadd.f32 %v327, %v418
        %v420 = vpop.f32.mrf.mxu0
        %v421 = vpop.f32.mrf.mxu0
        %v422 = vadd.f32 %v327, %v421
        %v423 = vpop.f32.mrf.mxu0
        %424 = vmatprep.mubr.bf16.mxu0 0
        %425 = vmatmul.mubr.bf16.gmra.mxu0 %v349
        %v426 = vpop.f32.mrf.mxu0
        %v427 = vadd.f32 %v327, %v426
        %v428 = vpop.f32.mrf.mxu0
        %v429 = vpop.f32.mrf.mxu0
        %v430 = vadd.f32 %v327, %v429
        %v431 = vpop.f32.mrf.mxu0
        %432 = vmatprep.mubr.bf16.mxu0 0
        %433 = vmatmul.mubr.bf16.gmra.mxu0 %v352
        %v434 = vpop.f32.mrf.mxu0
        %v435 = vadd.f32 %v327, %v434
        %v436 = vpop.f32.mrf.mxu0
        %v437 = vpop.f32.mrf.mxu0
        %v438 = vadd.f32 %v327, %v437
        %v439 = vpop.f32.mrf.mxu0
        %440 = vmatprep.mubr.bf16.mxu0 0
        %441 = vmatmul.mubr.bf16.gmra.mxu0 %v355
        %v442 = vpop.f32.mrf.mxu0
        %v443 = vadd.f32 %v327, %v442
        %v444 = vpop.f32.mrf.mxu0
        %v445 = vpop.f32.mrf.mxu0
        %v446 = vadd.f32 %v327, %v445
        %v447 = vpop.f32.mrf.mxu0
        %448 = vmatprep.mubr.bf16.mxu0 0
        %449 = vmatmul.mubr.bf16.gmra.mxu0 %v358
        %v450 = vpop.f32.mrf.mxu0
        %v451 = vadd.f32 %v327, %v450
        %v452 = vpop.f32.mrf.mxu0
        %v453 = vpop.f32.mrf.mxu0
        %v454 = vadd.f32 %v327, %v453
        %v455 = vpop.f32.mrf.mxu0
        %456 = vdwg.mxu0
        %v457 = vmax.f32 %v395, 0.0
        %v458 = vmax.f32 %v398, 0.0
        %v459 = vmax.f32 %v403, 0.0
        %v460 = vmax.f32 %v406, 0.0
        %v461 = vmax.f32 %v411, 0.0
        %v462 = vmax.f32 %v414, 0.0
        %v463 = vmax.f32 %v419, 0.0
        %v464 = vmax.f32 %v422, 0.0
        %v465 = vmax.f32 %v427, 0.0
        %v466 = vmax.f32 %v430, 0.0
        %v467 = vmax.f32 %v435, 0.0
        %v468 = vmax.f32 %v438, 0.0
        %v469 = vmax.f32 %v443, 0.0
        %v470 = vmax.f32 %v446, 0.0
        %v471 = vmax.f32 %v451, 0.0
        %v472 = vmax.f32 %v454, 0.0
        %v473 = vpack.c.bf16 %v458, %v457
        %v474 = vpack.c.bf16 %v460, %v459
        %v475 = vpack.c.bf16 %v462, %v461
        %v476 = vpack.c.bf16 %v464, %v463
        %v477 = vpack.c.bf16 %v466, %v465
        %v478 = vpack.c.bf16 %v468, %v467
        %v479 = vpack.c.bf16 %v470, %v469
        %v480 = vpack.c.bf16 %v472, %v471
        %v481 = vld [vmem:[#allocation2] sm:$0xf]
        %v482 = vld [vmem:[#allocation2 + $0x4] sm:$0xf]
        %v483 = vld [vmem:[#allocation2 + $0x8] sm:$0xf]
        %v484 = vld [vmem:[#allocation2 + $0xc] sm:$0xf]
        %v485 = vld [vmem:[#allocation2 + $0x10] sm:$0xf]
        %v486 = vld [vmem:[#allocation2 + $0x14] sm:$0xf]
        %v487 = vld [vmem:[#allocation2 + $0x18] sm:$0xf]
        %v488 = vld [vmem:[#allocation2 + $0x1c] sm:$0xf]
        %v489 = vld [vmem:[#allocation2 + $0x20] sm:$0xf]
        %v490 = vld [vmem:[#allocation2 + $0x24] sm:$0xf]
        %v491 = vld [vmem:[#allocation2 + $0x28] sm:$0xf]
        %v492 = vld [vmem:[#allocation2 + $0x2c] sm:$0xf]
        %v493 = vld [vmem:[#allocation2 + $0x30] sm:$0xf]
        %v494 = vld [vmem:[#allocation2 + $0x34] sm:$0xf]
        %v495 = vld [vmem:[#allocation2 + $0x38] sm:$0xf]
        %v496 = vld [vmem:[#allocation2 + $0x3c] sm:$0xf]
        %v497 = vld [vmem:[%s4] sm:$0x1]
        %v499 = vlaneseq
        %v500 = vshrl.u32 %v499, 7
        %v501 = vsub.s32 0, %v500
        %v502 = vrot.slane %v497, %v501
        %v520 = vunpack.c.l.b16 %v481
        %v521 = vunpack.c.l.b16 %v482
        %v522 = vunpack.c.l.b16 %v483
        %v523 = vunpack.c.l.b16 %v484
        %v524 = vunpack.c.l.b16 %v485
        %v525 = vunpack.c.l.b16 %v486
        %v526 = vunpack.c.l.b16 %v487
        %v527 = vunpack.c.l.b16 %v488
        %v528 = vunpack.c.l.b16 %v489
        %v529 = vunpack.c.l.b16 %v490
        %v530 = vunpack.c.l.b16 %v491
        %v531 = vunpack.c.l.b16 %v492
        %v532 = vunpack.c.l.b16 %v493
        %v533 = vunpack.c.l.b16 %v494
        %v534 = vunpack.c.l.b16 %v495
        %v535 = vunpack.c.l.b16 %v496
        %v536 = vpack.c.b16 %v521, %v520
        %v537 = vpack.c.b16 %v523, %v522
        %v538 = vpack.c.b16 %v525, %v524
        %v539 = vpack.c.b16 %v527, %v526
        %v540 = vpack.c.b16 %v529, %v528
        %v541 = vpack.c.b16 %v531, %v530
        %v542 = vpack.c.b16 %v533, %v532
        %v543 = vpack.c.b16 %v535, %v534
        %552 = vmatprep.subr.bf16.mxu0 0
        %553 = vmatpush1.bf16.msra.mxu0 %v543
        %554 = vmatprep.subr.bf16.mxu0 0
        %555 = vmatpush1.bf16.msra.mxu0 %v542
        %556 = vmatprep.subr.bf16.mxu0 0
        %557 = vmatpush1.bf16.msra.mxu0 %v541
        %558 = vmatprep.subr.bf16.mxu0 0
        %559 = vmatpush1.bf16.msra.mxu0 %v540
        %560 = vmatprep.subr.bf16.mxu0 0
        %561 = vmatpush1.bf16.msra.mxu0 %v539
        %562 = vmatprep.subr.bf16.mxu0 0
        %563 = vmatpush1.bf16.msra.mxu0 %v538
        %564 = vmatprep.subr.bf16.mxu0 0
        %565 = vmatpush1.bf16.msra.mxu0 %v537
        %566 = vmatprep.subr.bf16.mxu0 0
        %567 = vmatpush1.bf16.msra.mxu0 %v536
        %568 = vmatprep.subr.bf16.mxu0 0
        %569 = vmatpush2.bf16.msra.mxu0 0
        %570 = vmatprep.subr.bf16.mxu0 0
        %571 = vmatpush2.bf16.msra.mxu0 0
        %572 = vmatprep.subr.bf16.mxu0 0
        %573 = vmatpush2.bf16.msra.mxu0 0
        %574 = vmatprep.subr.bf16.mxu0 0
        %575 = vmatpush2.bf16.msra.mxu0 0
        %576 = vmatprep.subr.bf16.mxu0 0
        %577 = vmatpush2.bf16.msra.mxu0 0
        %578 = vmatprep.subr.bf16.mxu0 0
        %579 = vmatpush2.bf16.msra.mxu0 0
        %580 = vmatprep.subr.bf16.mxu0 0
        %581 = vmatpush2.bf16.msra.mxu0 0
        %582 = vmatprep.subr.bf16.mxu0 0
        %583 = vmatpush2.bf16.msra.mxu0 0
        %584 = vmatprep.mubr.bf16.mxu0 0
        %585 = vmatmul.mubr.bf16.gmra.mxu0 %v473
        %v586 = vpop.f32.mrf.mxu0
        %v587 = vadd.f32 %v502, %v586
        %v588 = vpop.f32.mrf.mxu0
        %v589 = vpop.f32.mrf.mxu0
        %v590 = vadd.f32 %v502, %v589
        %v591 = vpop.f32.mrf.mxu0
        %592 = vmatprep.mubr.bf16.mxu0 0
        %593 = vmatmul.mubr.bf16.gmra.mxu0 %v474
        %v594 = vpop.f32.mrf.mxu0
        %v595 = vadd.f32 %v502, %v594
        %v596 = vpop.f32.mrf.mxu0
        %v597 = vpop.f32.mrf.mxu0
        %v598 = vadd.f32 %v502, %v597
        %v599 = vpop.f32.mrf.mxu0
        %600 = vmatprep.mubr.bf16.mxu0 0
        %601 = vmatmul.mubr.bf16.gmra.mxu0 %v475
        %v602 = vpop.f32.mrf.mxu0
        %v603 = vadd.f32 %v502, %v602
        %v604 = vpop.f32.mrf.mxu0
        %v605 = vpop.f32.mrf.mxu0
        %v606 = vadd.f32 %v502, %v605
        %v607 = vpop.f32.mrf.mxu0
        %608 = vmatprep.mubr.bf16.mxu0 0
        %609 = vmatmul.mubr.bf16.gmra.mxu0 %v476
        %v610 = vpop.f32.mrf.mxu0
        %v611 = vadd.f32 %v502, %v610
        %v612 = vpop.f32.mrf.mxu0
        %v613 = vpop.f32.mrf.mxu0
        %v614 = vadd.f32 %v502, %v613
        %v615 = vpop.f32.mrf.mxu0
        %616 = vmatprep.mubr.bf16.mxu0 0
        %617 = vmatmul.mubr.bf16.gmra.mxu0 %v477
        %v618 = vpop.f32.mrf.mxu0
        %v619 = vadd.f32 %v502, %v618
        %v620 = vpop.f32.mrf.mxu0
        %v621 = vpop.f32.mrf.mxu0
        %v622 = vadd.f32 %v502, %v621
        %v623 = vpop.f32.mrf.mxu0
        %624 = vmatprep.mubr.bf16.mxu0 0
        %625 = vmatmul.mubr.bf16.gmra.mxu0 %v478
        %v626 = vpop.f32.mrf.mxu0
        %v627 = vadd.f32 %v502, %v626
        %v628 = vpop.f32.mrf.mxu0
        %v629 = vpop.f32.mrf.mxu0
        %v630 = vadd.f32 %v502, %v629
        %v631 = vpop.f32.mrf.mxu0
        %632 = vmatprep.mubr.bf16.mxu0 0
        %633 = vmatmul.mubr.bf16.gmra.mxu0 %v479
        %v634 = vpop.f32.mrf.mxu0
        %v635 = vadd.f32 %v502, %v634
        %v636 = vpop.f32.mrf.mxu0
        %v637 = vpop.f32.mrf.mxu0
        %v638 = vadd.f32 %v502, %v637
        %v639 = vpop.f32.mrf.mxu0
        %640 = vmatprep.mubr.bf16.mxu0 0
        %641 = vmatmul.mubr.bf16.gmra.mxu0 %v480
        %v642 = vpop.f32.mrf.mxu0
        %v643 = vadd.f32 %v502, %v642
        %v644 = vpop.f32.mrf.mxu0
        %v645 = vpop.f32.mrf.mxu0
        %v646 = vadd.f32 %v502, %v645
        %v647 = vpop.f32.mrf.mxu0
        %648 = vdwg.mxu0
        %v649 = vmax.f32 %v587, 0.0
        %v650 = vmax.f32 %v590, 0.0
        %v651 = vmax.f32 %v595, 0.0
        %v652 = vmax.f32 %v598, 0.0
        %v653 = vmax.f32 %v603, 0.0
        %v654 = vmax.f32 %v606, 0.0
        %v655 = vmax.f32 %v611, 0.0
        %v656 = vmax.f32 %v614, 0.0
        %v657 = vmax.f32 %v619, 0.0
        %v658 = vmax.f32 %v622, 0.0
        %v659 = vmax.f32 %v627, 0.0
        %v660 = vmax.f32 %v630, 0.0
        %v661 = vmax.f32 %v635, 0.0
        %v662 = vmax.f32 %v638, 0.0
        %v663 = vmax.f32 %v643, 0.0
        %v664 = vmax.f32 %v646, 0.0
        %v665 = vpack.c.bf16 %v650, %v649
        %v666 = vpack.c.bf16 %v652, %v651
        %v667 = vpack.c.bf16 %v654, %v653
        %v668 = vpack.c.bf16 %v656, %v655
        %v669 = vpack.c.bf16 %v658, %v657
        %v670 = vpack.c.bf16 %v660, %v659
        %v671 = vpack.c.bf16 %v662, %v661
        %v672 = vpack.c.bf16 %v664, %v663
        %s673 = scalar_lea.vmem [#allocation2], 64
        %v674 = vld [vmem:[%s673] sm:$0xf]
        %v675 = vld [vmem:[%s673 + $0x4] sm:$0xf]
        %v676 = vld [vmem:[%s673 + $0x8] sm:$0xf]
        %v677 = vld [vmem:[%s673 + $0xc] sm:$0xf]
        %v678 = vld [vmem:[%s673 + $0x10] sm:$0xf]
        %v679 = vld [vmem:[%s673 + $0x14] sm:$0xf]
        %v680 = vld [vmem:[%s673 + $0x18] sm:$0xf]
        %v681 = vld [vmem:[%s673 + $0x1c] sm:$0xf]
        %v682 = vld [vmem:[%s673 + $0x20] sm:$0xf]
        %v683 = vld [vmem:[%s673 + $0x24] sm:$0xf]
        %v684 = vld [vmem:[%s673 + $0x28] sm:$0xf]
        %v685 = vld [vmem:[%s673 + $0x2c] sm:$0xf]
        %v686 = vld [vmem:[%s673 + $0x30] sm:$0xf]
        %v687 = vld [vmem:[%s673 + $0x34] sm:$0xf]
        %v688 = vld [vmem:[%s673 + $0x38] sm:$0xf]
        %v689 = vld [vmem:[%s673 + $0x3c] sm:$0xf]
        %s690 = scalar_lea.vmem %s4, 1
        %v691 = vld [vmem:[%s690] sm:$0x1]
        %v693 = vlaneseq
        %v694 = vshrl.u32 %v693, 7
        %v695 = vsub.s32 0, %v694
        %v696 = vrot.slane %v691, %v695
        %v714 = vunpack.c.l.b16 %v674
        %v715 = vunpack.c.l.b16 %v675
        %v716 = vunpack.c.l.b16 %v676
        %v717 = vunpack.c.l.b16 %v677
        %v718 = vunpack.c.l.b16 %v678
        %v719 = vunpack.c.l.b16 %v679
        %v720 = vunpack.c.l.b16 %v680
        %v721 = vunpack.c.l.b16 %v681
        %v722 = vunpack.c.l.b16 %v682
        %v723 = vunpack.c.l.b16 %v683
        %v724 = vunpack.c.l.b16 %v684
        %v725 = vunpack.c.l.b16 %v685
        %v726 = vunpack.c.l.b16 %v686
        %v727 = vunpack.c.l.b16 %v687
        %v728 = vunpack.c.l.b16 %v688
        %v729 = vunpack.c.l.b16 %v689
        %v730 = vpack.c.b16 %v715, %v714
        %v731 = vpack.c.b16 %v717, %v716
        %v732 = vpack.c.b16 %v719, %v718
        %v733 = vpack.c.b16 %v721, %v720
        %v734 = vpack.c.b16 %v723, %v722
        %v735 = vpack.c.b16 %v725, %v724
        %v736 = vpack.c.b16 %v727, %v726
        %v737 = vpack.c.b16 %v729, %v728
        %746 = vmatprep.subr.bf16.mxu0 0
        %747 = vmatpush1.bf16.msra.mxu0 %v737
        %748 = vmatprep.subr.bf16.mxu0 0
        %749 = vmatpush1.bf16.msra.mxu0 %v736
        %750 = vmatprep.subr.bf16.mxu0 0
        %751 = vmatpush1.bf16.msra.mxu0 %v735
        %752 = vmatprep.subr.bf16.mxu0 0
        %753 = vmatpush1.bf16.msra.mxu0 %v734
        %754 = vmatprep.subr.bf16.mxu0 0
        %755 = vmatpush1.bf16.msra.mxu0 %v733
        %756 = vmatprep.subr.bf16.mxu0 0
        %757 = vmatpush1.bf16.msra.mxu0 %v732
        %758 = vmatprep.subr.bf16.mxu0 0
        %759 = vmatpush1.bf16.msra.mxu0 %v731
        %760 = vmatprep.subr.bf16.mxu0 0
        %761 = vmatpush1.bf16.msra.mxu0 %v730
        %762 = vmatprep.subr.bf16.mxu0 0
        %763 = vmatpush2.bf16.msra.mxu0 0
        %764 = vmatprep.subr.bf16.mxu0 0
        %765 = vmatpush2.bf16.msra.mxu0 0
        %766 = vmatprep.subr.bf16.mxu0 0
        %767 = vmatpush2.bf16.msra.mxu0 0
        %768 = vmatprep.subr.bf16.mxu0 0
        %769 = vmatpush2.bf16.msra.mxu0 0
        %770 = vmatprep.subr.bf16.mxu0 0
        %771 = vmatpush2.bf16.msra.mxu0 0
        %772 = vmatprep.subr.bf16.mxu0 0
        %773 = vmatpush2.bf16.msra.mxu0 0
        %774 = vmatprep.subr.bf16.mxu0 0
        %775 = vmatpush2.bf16.msra.mxu0 0
        %776 = vmatprep.subr.bf16.mxu0 0
        %777 = vmatpush2.bf16.msra.mxu0 0
        %778 = vmatprep.mubr.bf16.mxu0 0
        %779 = vmatmul.mubr.bf16.gmra.mxu0 %v665
        %v780 = vpop.f32.mrf.mxu0
        %v781 = vadd.f32 %v696, %v780
        %v782 = vpop.f32.mrf.mxu0
        %v783 = vpop.f32.mrf.mxu0
        %v784 = vadd.f32 %v696, %v783
        %v785 = vpop.f32.mrf.mxu0
        %786 = vmatprep.mubr.bf16.mxu0 0
        %787 = vmatmul.mubr.bf16.gmra.mxu0 %v666
        %v788 = vpop.f32.mrf.mxu0
        %v789 = vadd.f32 %v696, %v788
        %v790 = vpop.f32.mrf.mxu0
        %v791 = vpop.f32.mrf.mxu0
        %v792 = vadd.f32 %v696, %v791
        %v793 = vpop.f32.mrf.mxu0
        %794 = vmatprep.mubr.bf16.mxu0 0
        %795 = vmatmul.mubr.bf16.gmra.mxu0 %v667
        %v796 = vpop.f32.mrf.mxu0
        %v797 = vadd.f32 %v696, %v796
        %v798 = vpop.f32.mrf.mxu0
        %v799 = vpop.f32.mrf.mxu0
        %v800 = vadd.f32 %v696, %v799
        %v801 = vpop.f32.mrf.mxu0
        %802 = vmatprep.mubr.bf16.mxu0 0
        %803 = vmatmul.mubr.bf16.gmra.mxu0 %v668
        %v804 = vpop.f32.mrf.mxu0
        %v805 = vadd.f32 %v696, %v804
        %v806 = vpop.f32.mrf.mxu0
        %v807 = vpop.f32.mrf.mxu0
        %v808 = vadd.f32 %v696, %v807
        %v809 = vpop.f32.mrf.mxu0
        %810 = vmatprep.mubr.bf16.mxu0 0
        %811 = vmatmul.mubr.bf16.gmra.mxu0 %v669
        %v812 = vpop.f32.mrf.mxu0
        %v813 = vadd.f32 %v696, %v812
        %v814 = vpop.f32.mrf.mxu0
        %v815 = vpop.f32.mrf.mxu0
        %v816 = vadd.f32 %v696, %v815
        %v817 = vpop.f32.mrf.mxu0
        %818 = vmatprep.mubr.bf16.mxu0 0
        %819 = vmatmul.mubr.bf16.gmra.mxu0 %v670
        %v820 = vpop.f32.mrf.mxu0
        %v821 = vadd.f32 %v696, %v820
        %v822 = vpop.f32.mrf.mxu0
        %v823 = vpop.f32.mrf.mxu0
        %v824 = vadd.f32 %v696, %v823
        %v825 = vpop.f32.mrf.mxu0
        %826 = vmatprep.mubr.bf16.mxu0 0
        %827 = vmatmul.mubr.bf16.gmra.mxu0 %v671
        %v828 = vpop.f32.mrf.mxu0
        %v829 = vadd.f32 %v696, %v828
        %v830 = vpop.f32.mrf.mxu0
        %v831 = vpop.f32.mrf.mxu0
        %v832 = vadd.f32 %v696, %v831
        %v833 = vpop.f32.mrf.mxu0
        %834 = vmatprep.mubr.bf16.mxu0 0
        %835 = vmatmul.mubr.bf16.gmra.mxu0 %v672
        %v836 = vpop.f32.mrf.mxu0
        %v837 = vadd.f32 %v696, %v836
        %v838 = vpop.f32.mrf.mxu0
        %v839 = vpop.f32.mrf.mxu0
        %v840 = vadd.f32 %v696, %v839
        %v841 = vpop.f32.mrf.mxu0
        %842 = vdwg.mxu0
        %v843 = vmax.f32 %v781, 0.0
        %v844 = vmax.f32 %v784, 0.0
        %v845 = vmax.f32 %v789, 0.0
        %v846 = vmax.f32 %v792, 0.0
        %v847 = vmax.f32 %v797, 0.0
        %v848 = vmax.f32 %v800, 0.0
        %v849 = vmax.f32 %v805, 0.0
        %v850 = vmax.f32 %v808, 0.0
        %v851 = vmax.f32 %v813, 0.0
        %v852 = vmax.f32 %v816, 0.0
        %v853 = vmax.f32 %v821, 0.0
        %v854 = vmax.f32 %v824, 0.0
        %v855 = vmax.f32 %v829, 0.0
        %v856 = vmax.f32 %v832, 0.0
        %v857 = vmax.f32 %v837, 0.0
        %v858 = vmax.f32 %v840, 0.0
        %v859 = vpack.c.bf16 %v844, %v843
        %v860 = vpack.c.bf16 %v846, %v845
        %v861 = vpack.c.bf16 %v848, %v847
        %v862 = vpack.c.bf16 %v850, %v849
        %v863 = vpack.c.bf16 %v852, %v851
        %v864 = vpack.c.bf16 %v854, %v853
        %v865 = vpack.c.bf16 %v856, %v855
        %v866 = vpack.c.bf16 %v858, %v857
        %s867 = scalar_lea.vmem [#allocation2], 128
        %v868 = vld [vmem:[%s867] sm:$0xf]
        %v869 = vld [vmem:[%s867 + $0x4] sm:$0xf]
        %v870 = vld [vmem:[%s867 + $0x8] sm:$0xf]
        %v871 = vld [vmem:[%s867 + $0xc] sm:$0xf]
        %v872 = vld [vmem:[%s867 + $0x10] sm:$0xf]
        %v873 = vld [vmem:[%s867 + $0x14] sm:$0xf]
        %v874 = vld [vmem:[%s867 + $0x18] sm:$0xf]
        %v875 = vld [vmem:[%s867 + $0x1c] sm:$0xf]
        %v876 = vld [vmem:[%s867 + $0x20] sm:$0xf]
        %v877 = vld [vmem:[%s867 + $0x24] sm:$0xf]
        %v878 = vld [vmem:[%s867 + $0x28] sm:$0xf]
        %v879 = vld [vmem:[%s867 + $0x2c] sm:$0xf]
        %v880 = vld [vmem:[%s867 + $0x30] sm:$0xf]
        %v881 = vld [vmem:[%s867 + $0x34] sm:$0xf]
        %v882 = vld [vmem:[%s867 + $0x38] sm:$0xf]
        %v883 = vld [vmem:[%s867 + $0x3c] sm:$0xf]
        %s884 = scalar_lea.vmem %s4, 2
        %v885 = vld [vmem:[%s884] sm:$0x1]
        %v887 = vlaneseq
        %v888 = vshrl.u32 %v887, 7
        %v889 = vsub.s32 0, %v888
        %v890 = vrot.slane %v885, %v889
        %v908 = vunpack.c.l.b16 %v868
        %v909 = vunpack.c.l.b16 %v869
        %v910 = vunpack.c.l.b16 %v870
        %v911 = vunpack.c.l.b16 %v871
        %v912 = vunpack.c.l.b16 %v872
        %v913 = vunpack.c.l.b16 %v873
        %v914 = vunpack.c.l.b16 %v874
        %v915 = vunpack.c.l.b16 %v875
        %v916 = vunpack.c.l.b16 %v876
        %v917 = vunpack.c.l.b16 %v877
        %v918 = vunpack.c.l.b16 %v878
        %v919 = vunpack.c.l.b16 %v879
        %v920 = vunpack.c.l.b16 %v880
        %v921 = vunpack.c.l.b16 %v881
        %v922 = vunpack.c.l.b16 %v882
        %v923 = vunpack.c.l.b16 %v883
        %v924 = vpack.c.b16 %v909, %v908
        %v925 = vpack.c.b16 %v911, %v910
        %v926 = vpack.c.b16 %v913, %v912
        %v927 = vpack.c.b16 %v915, %v914
        %v928 = vpack.c.b16 %v917, %v916
        %v929 = vpack.c.b16 %v919, %v918
        %v930 = vpack.c.b16 %v921, %v920
        %v931 = vpack.c.b16 %v923, %v922
        %940 = vmatprep.subr.bf16.mxu0 0
        %941 = vmatpush1.bf16.msra.mxu0 %v931
        %942 = vmatprep.subr.bf16.mxu0 0
        %943 = vmatpush1.bf16.msra.mxu0 %v930
        %944 = vmatprep.subr.bf16.mxu0 0
        %945 = vmatpush1.bf16.msra.mxu0 %v929
        %946 = vmatprep.subr.bf16.mxu0 0
        %947 = vmatpush1.bf16.msra.mxu0 %v928
        %948 = vmatprep.subr.bf16.mxu0 0
        %949 = vmatpush1.bf16.msra.mxu0 %v927
        %950 = vmatprep.subr.bf16.mxu0 0
        %951 = vmatpush1.bf16.msra.mxu0 %v926
        %952 = vmatprep.subr.bf16.mxu0 0
        %953 = vmatpush1.bf16.msra.mxu0 %v925
        %954 = vmatprep.subr.bf16.mxu0 0
        %955 = vmatpush1.bf16.msra.mxu0 %v924
        %956 = vmatprep.subr.bf16.mxu0 0
        %957 = vmatpush2.bf16.msra.mxu0 0
        %958 = vmatprep.subr.bf16.mxu0 0
        %959 = vmatpush2.bf16.msra.mxu0 0
        %960 = vmatprep.subr.bf16.mxu0 0
        %961 = vmatpush2.bf16.msra.mxu0 0
        %962 = vmatprep.subr.bf16.mxu0 0
        %963 = vmatpush2.bf16.msra.mxu0 0
        %964 = vmatprep.subr.bf16.mxu0 0
        %965 = vmatpush2.bf16.msra.mxu0 0
        %966 = vmatprep.subr.bf16.mxu0 0
        %967 = vmatpush2.bf16.msra.mxu0 0
        %968 = vmatprep.subr.bf16.mxu0 0
        %969 = vmatpush2.bf16.msra.mxu0 0
        %970 = vmatprep.subr.bf16.mxu0 0
        %971 = vmatpush2.bf16.msra.mxu0 0
        %972 = vmatprep.mubr.bf16.mxu0 0
        %973 = vmatmul.mubr.bf16.gmra.mxu0 %v859
        %v974 = vpop.f32.mrf.mxu0
        %v975 = vadd.f32 %v890, %v974
        %v976 = vpop.f32.mrf.mxu0
        %v977 = vpop.f32.mrf.mxu0
        %v978 = vadd.f32 %v890, %v977
        %v979 = vpop.f32.mrf.mxu0
        %980 = vmatprep.mubr.bf16.mxu0 0
        %981 = vmatmul.mubr.bf16.gmra.mxu0 %v860
        %v982 = vpop.f32.mrf.mxu0
        %v983 = vadd.f32 %v890, %v982
        %v984 = vpop.f32.mrf.mxu0
        %v985 = vpop.f32.mrf.mxu0
        %v986 = vadd.f32 %v890, %v985
        %v987 = vpop.f32.mrf.mxu0
        %988 = vmatprep.mubr.bf16.mxu0 0
        %989 = vmatmul.mubr.bf16.gmra.mxu0 %v861
        %v990 = vpop.f32.mrf.mxu0
        %v991 = vadd.f32 %v890, %v990
        %v992 = vpop.f32.mrf.mxu0
        %v993 = vpop.f32.mrf.mxu0
        %v994 = vadd.f32 %v890, %v993
        %v995 = vpop.f32.mrf.mxu0
        %996 = vmatprep.mubr.bf16.mxu0 0
        %997 = vmatmul.mubr.bf16.gmra.mxu0 %v862
        %v998 = vpop.f32.mrf.mxu0
        %v999 = vadd.f32 %v890, %v998
        %v1000 = vpop.f32.mrf.mxu0
        %v1001 = vpop.f32.mrf.mxu0
        %v1002 = vadd.f32 %v890, %v1001
        %v1003 = vpop.f32.mrf.mxu0
        %1004 = vmatprep.mubr.bf16.mxu0 0
        %1005 = vmatmul.mubr.bf16.gmra.mxu0 %v863
        %v1006 = vpop.f32.mrf.mxu0
        %v1007 = vadd.f32 %v890, %v1006
        %v1008 = vpop.f32.mrf.mxu0
        %v1009 = vpop.f32.mrf.mxu0
        %v1010 = vadd.f32 %v890, %v1009
        %v1011 = vpop.f32.mrf.mxu0
        %1012 = vmatprep.mubr.bf16.mxu0 0
        %1013 = vmatmul.mubr.bf16.gmra.mxu0 %v864
        %v1014 = vpop.f32.mrf.mxu0
        %v1015 = vadd.f32 %v890, %v1014
        %v1016 = vpop.f32.mrf.mxu0
        %v1017 = vpop.f32.mrf.mxu0
        %v1018 = vadd.f32 %v890, %v1017
        %v1019 = vpop.f32.mrf.mxu0
        %1020 = vmatprep.mubr.bf16.mxu0 0
        %1021 = vmatmul.mubr.bf16.gmra.mxu0 %v865
        %v1022 = vpop.f32.mrf.mxu0
        %v1023 = vadd.f32 %v890, %v1022
        %v1024 = vpop.f32.mrf.mxu0
        %v1025 = vpop.f32.mrf.mxu0
        %v1026 = vadd.f32 %v890, %v1025
        %v1027 = vpop.f32.mrf.mxu0
        %1028 = vmatprep.mubr.bf16.mxu0 0
        %1029 = vmatmul.mubr.bf16.gmra.mxu0 %v866
        %v1030 = vpop.f32.mrf.mxu0
        %v1031 = vadd.f32 %v890, %v1030
        %v1032 = vpop.f32.mrf.mxu0
        %v1033 = vpop.f32.mrf.mxu0
        %v1034 = vadd.f32 %v890, %v1033
        %v1035 = vpop.f32.mrf.mxu0
        %1036 = vdwg.mxu0
        %v1037 = vmax.f32 %v975, 0.0
        %v1038 = vmax.f32 %v978, 0.0
        %v1039 = vmax.f32 %v983, 0.0
        %v1040 = vmax.f32 %v986, 0.0
        %v1041 = vmax.f32 %v991, 0.0
        %v1042 = vmax.f32 %v994, 0.0
        %v1043 = vmax.f32 %v999, 0.0
        %v1044 = vmax.f32 %v1002, 0.0
        %v1045 = vmax.f32 %v1007, 0.0
        %v1046 = vmax.f32 %v1010, 0.0
        %v1047 = vmax.f32 %v1015, 0.0
        %v1048 = vmax.f32 %v1018, 0.0
        %v1049 = vmax.f32 %v1023, 0.0
        %v1050 = vmax.f32 %v1026, 0.0
        %v1051 = vmax.f32 %v1031, 0.0
        %v1052 = vmax.f32 %v1034, 0.0
        %v1053 = vpack.c.bf16 %v1038, %v1037
        %v1054 = vpack.c.bf16 %v1040, %v1039
        %v1055 = vpack.c.bf16 %v1042, %v1041
        %v1056 = vpack.c.bf16 %v1044, %v1043
        %v1057 = vpack.c.bf16 %v1046, %v1045
        %v1058 = vpack.c.bf16 %v1048, %v1047
        %v1059 = vpack.c.bf16 %v1050, %v1049
        %v1060 = vpack.c.bf16 %v1052, %v1051
        %s1061 = scalar_lea.vmem [#allocation2], 192
        %v1062 = vld [vmem:[%s1061] sm:$0xf]
        %v1063 = vld [vmem:[%s1061 + $0x4] sm:$0xf]
        %v1064 = vld [vmem:[%s1061 + $0x8] sm:$0xf]
        %v1065 = vld [vmem:[%s1061 + $0xc] sm:$0xf]
        %v1066 = vld [vmem:[%s1061 + $0x10] sm:$0xf]
        %v1067 = vld [vmem:[%s1061 + $0x14] sm:$0xf]
        %v1068 = vld [vmem:[%s1061 + $0x18] sm:$0xf]
        %v1069 = vld [vmem:[%s1061 + $0x1c] sm:$0xf]
        %v1070 = vld [vmem:[%s1061 + $0x20] sm:$0xf]
        %v1071 = vld [vmem:[%s1061 + $0x24] sm:$0xf]
        %v1072 = vld [vmem:[%s1061 + $0x28] sm:$0xf]
        %v1073 = vld [vmem:[%s1061 + $0x2c] sm:$0xf]
        %v1074 = vld [vmem:[%s1061 + $0x30] sm:$0xf]
        %v1075 = vld [vmem:[%s1061 + $0x34] sm:$0xf]
        %v1076 = vld [vmem:[%s1061 + $0x38] sm:$0xf]
        %v1077 = vld [vmem:[%s1061 + $0x3c] sm:$0xf]
        %s1078 = scalar_lea.vmem %s4, 3
        %v1079 = vld [vmem:[%s1078] sm:$0x1]
        %v1081 = vlaneseq
        %v1082 = vshrl.u32 %v1081, 7
        %v1083 = vsub.s32 0, %v1082
        %v1084 = vrot.slane %v1079, %v1083
        %v1102 = vunpack.c.l.b16 %v1062
        %v1103 = vunpack.c.l.b16 %v1063
        %v1104 = vunpack.c.l.b16 %v1064
        %v1105 = vunpack.c.l.b16 %v1065
        %v1106 = vunpack.c.l.b16 %v1066
        %v1107 = vunpack.c.l.b16 %v1067
        %v1108 = vunpack.c.l.b16 %v1068
        %v1109 = vunpack.c.l.b16 %v1069
        %v1110 = vunpack.c.l.b16 %v1070
        %v1111 = vunpack.c.l.b16 %v1071
        %v1112 = vunpack.c.l.b16 %v1072
        %v1113 = vunpack.c.l.b16 %v1073
        %v1114 = vunpack.c.l.b16 %v1074
        %v1115 = vunpack.c.l.b16 %v1075
        %v1116 = vunpack.c.l.b16 %v1076
        %v1117 = vunpack.c.l.b16 %v1077
        %v1118 = vpack.c.b16 %v1103, %v1102
        %v1119 = vpack.c.b16 %v1105, %v1104
        %v1120 = vpack.c.b16 %v1107, %v1106
        %v1121 = vpack.c.b16 %v1109, %v1108
        %v1122 = vpack.c.b16 %v1111, %v1110
        %v1123 = vpack.c.b16 %v1113, %v1112
        %v1124 = vpack.c.b16 %v1115, %v1114
        %v1125 = vpack.c.b16 %v1117, %v1116
        %1134 = vmatprep.subr.bf16.mxu0 0
        %1135 = vmatpush1.bf16.msra.mxu0 %v1125
        %1136 = vmatprep.subr.bf16.mxu0 0
        %1137 = vmatpush1.bf16.msra.mxu0 %v1124
        %1138 = vmatprep.subr.bf16.mxu0 0
        %1139 = vmatpush1.bf16.msra.mxu0 %v1123
        %1140 = vmatprep.subr.bf16.mxu0 0
        %1141 = vmatpush1.bf16.msra.mxu0 %v1122
        %1142 = vmatprep.subr.bf16.mxu0 0
        %1143 = vmatpush1.bf16.msra.mxu0 %v1121
        %1144 = vmatprep.subr.bf16.mxu0 0
        %1145 = vmatpush1.bf16.msra.mxu0 %v1120
        %1146 = vmatprep.subr.bf16.mxu0 0
        %1147 = vmatpush1.bf16.msra.mxu0 %v1119
        %1148 = vmatprep.subr.bf16.mxu0 0
        %1149 = vmatpush1.bf16.msra.mxu0 %v1118
        %1150 = vmatprep.subr.bf16.mxu0 0
        %1151 = vmatpush2.bf16.msra.mxu0 0
        %1152 = vmatprep.subr.bf16.mxu0 0
        %1153 = vmatpush2.bf16.msra.mxu0 0
        %1154 = vmatprep.subr.bf16.mxu0 0
        %1155 = vmatpush2.bf16.msra.mxu0 0
        %1156 = vmatprep.subr.bf16.mxu0 0
        %1157 = vmatpush2.bf16.msra.mxu0 0
        %1158 = vmatprep.subr.bf16.mxu0 0
        %1159 = vmatpush2.bf16.msra.mxu0 0
        %1160 = vmatprep.subr.bf16.mxu0 0
        %1161 = vmatpush2.bf16.msra.mxu0 0
        %1162 = vmatprep.subr.bf16.mxu0 0
        %1163 = vmatpush2.bf16.msra.mxu0 0
        %1164 = vmatprep.subr.bf16.mxu0 0
        %1165 = vmatpush2.bf16.msra.mxu0 0
        %1166 = vmatprep.mubr.bf16.mxu0 0
        %1167 = vmatmul.mubr.bf16.gmra.mxu0 %v1053
        %v1168 = vpop.f32.mrf.mxu0
        %v1169 = vadd.f32 %v1084, %v1168
        %v1170 = vpop.f32.mrf.mxu0
        %v1171 = vpop.f32.mrf.mxu0
        %v1172 = vadd.f32 %v1084, %v1171
        %v1173 = vpop.f32.mrf.mxu0
        %1174 = vmatprep.mubr.bf16.mxu0 0
        %1175 = vmatmul.mubr.bf16.gmra.mxu0 %v1054
        %v1176 = vpop.f32.mrf.mxu0
        %v1177 = vadd.f32 %v1084, %v1176
        %v1178 = vpop.f32.mrf.mxu0
        %v1179 = vpop.f32.mrf.mxu0
        %v1180 = vadd.f32 %v1084, %v1179
        %v1181 = vpop.f32.mrf.mxu0
        %1182 = vmatprep.mubr.bf16.mxu0 0
        %1183 = vmatmul.mubr.bf16.gmra.mxu0 %v1055
        %v1184 = vpop.f32.mrf.mxu0
        %v1185 = vadd.f32 %v1084, %v1184
        %v1186 = vpop.f32.mrf.mxu0
        %v1187 = vpop.f32.mrf.mxu0
        %v1188 = vadd.f32 %v1084, %v1187
        %v1189 = vpop.f32.mrf.mxu0
        %1190 = vmatprep.mubr.bf16.mxu0 0
        %1191 = vmatmul.mubr.bf16.gmra.mxu0 %v1056
        %v1192 = vpop.f32.mrf.mxu0
        %v1193 = vadd.f32 %v1084, %v1192
        %v1194 = vpop.f32.mrf.mxu0
        %v1195 = vpop.f32.mrf.mxu0
        %v1196 = vadd.f32 %v1084, %v1195
        %v1197 = vpop.f32.mrf.mxu0
        %1198 = vmatprep.mubr.bf16.mxu0 0
        %1199 = vmatmul.mubr.bf16.gmra.mxu0 %v1057
        %v1200 = vpop.f32.mrf.mxu0
        %v1201 = vadd.f32 %v1084, %v1200
        %v1202 = vpop.f32.mrf.mxu0
        %v1203 = vpop.f32.mrf.mxu0
        %v1204 = vadd.f32 %v1084, %v1203
        %v1205 = vpop.f32.mrf.mxu0
        %1206 = vmatprep.mubr.bf16.mxu0 0
        %1207 = vmatmul.mubr.bf16.gmra.mxu0 %v1058
        %v1208 = vpop.f32.mrf.mxu0
        %v1209 = vadd.f32 %v1084, %v1208
        %v1210 = vpop.f32.mrf.mxu0
        %v1211 = vpop.f32.mrf.mxu0
        %v1212 = vadd.f32 %v1084, %v1211
        %v1213 = vpop.f32.mrf.mxu0
        %1214 = vmatprep.mubr.bf16.mxu0 0
        %1215 = vmatmul.mubr.bf16.gmra.mxu0 %v1059
        %v1216 = vpop.f32.mrf.mxu0
        %v1217 = vadd.f32 %v1084, %v1216
        %v1218 = vpop.f32.mrf.mxu0
        %v1219 = vpop.f32.mrf.mxu0
        %v1220 = vadd.f32 %v1084, %v1219
        %v1221 = vpop.f32.mrf.mxu0
        %1222 = vmatprep.mubr.bf16.mxu0 0
        %1223 = vmatmul.mubr.bf16.gmra.mxu0 %v1060
        %v1224 = vpop.f32.mrf.mxu0
        %v1225 = vadd.f32 %v1084, %v1224
        %v1226 = vpop.f32.mrf.mxu0
        %v1227 = vpop.f32.mrf.mxu0
        %v1228 = vadd.f32 %v1084, %v1227
        %v1229 = vpop.f32.mrf.mxu0
        %1230 = vdwg.mxu0
        %v1231 = vmax.f32 %v1169, 0.0
        %v1232 = vmax.f32 %v1172, 0.0
        %v1233 = vmax.f32 %v1177, 0.0
        %v1234 = vmax.f32 %v1180, 0.0
        %v1235 = vmax.f32 %v1185, 0.0
        %v1236 = vmax.f32 %v1188, 0.0
        %v1237 = vmax.f32 %v1193, 0.0
        %v1238 = vmax.f32 %v1196, 0.0
        %v1239 = vmax.f32 %v1201, 0.0
        %v1240 = vmax.f32 %v1204, 0.0
        %v1241 = vmax.f32 %v1209, 0.0
        %v1242 = vmax.f32 %v1212, 0.0
        %v1243 = vmax.f32 %v1217, 0.0
        %v1244 = vmax.f32 %v1220, 0.0
        %v1245 = vmax.f32 %v1225, 0.0
        %v1246 = vmax.f32 %v1228, 0.0
        %v1247 = vpack.c.bf16 %v1232, %v1231
        %v1248 = vpack.c.bf16 %v1234, %v1233
        %v1249 = vpack.c.bf16 %v1236, %v1235
        %v1250 = vpack.c.bf16 %v1238, %v1237
        %v1251 = vpack.c.bf16 %v1240, %v1239
        %v1252 = vpack.c.bf16 %v1242, %v1241
        %v1253 = vpack.c.bf16 %v1244, %v1243
        %v1254 = vpack.c.bf16 %v1246, %v1245
        %s1255 = scalar_lea.vmem [#allocation2], 256
        %v1256 = vld [vmem:[%s1255] sm:$0xf]
        %v1257 = vld [vmem:[%s1255 + $0x4] sm:$0xf]
        %v1258 = vld [vmem:[%s1255 + $0x8] sm:$0xf]
        %v1259 = vld [vmem:[%s1255 + $0xc] sm:$0xf]
        %v1260 = vld [vmem:[%s1255 + $0x10] sm:$0xf]
        %v1261 = vld [vmem:[%s1255 + $0x14] sm:$0xf]
        %v1262 = vld [vmem:[%s1255 + $0x18] sm:$0xf]
        %v1263 = vld [vmem:[%s1255 + $0x1c] sm:$0xf]
        %v1264 = vld [vmem:[%s1255 + $0x20] sm:$0xf]
        %v1265 = vld [vmem:[%s1255 + $0x24] sm:$0xf]
        %v1266 = vld [vmem:[%s1255 + $0x28] sm:$0xf]
        %v1267 = vld [vmem:[%s1255 + $0x2c] sm:$0xf]
        %v1268 = vld [vmem:[%s1255 + $0x30] sm:$0xf]
        %v1269 = vld [vmem:[%s1255 + $0x34] sm:$0xf]
        %v1270 = vld [vmem:[%s1255 + $0x38] sm:$0xf]
        %v1271 = vld [vmem:[%s1255 + $0x3c] sm:$0xf]
        %s1272 = scalar_lea.vmem %s4, 4
        %v1273 = vld [vmem:[%s1272] sm:$0x1]
        %v1275 = vlaneseq
        %v1276 = vshrl.u32 %v1275, 7
        %v1277 = vsub.s32 0, %v1276
        %v1278 = vrot.slane %v1273, %v1277
        %v1296 = vunpack.c.l.b16 %v1256
        %v1297 = vunpack.c.l.b16 %v1257
        %v1298 = vunpack.c.l.b16 %v1258
        %v1299 = vunpack.c.l.b16 %v1259
        %v1300 = vunpack.c.l.b16 %v1260
        %v1301 = vunpack.c.l.b16 %v1261
        %v1302 = vunpack.c.l.b16 %v1262
        %v1303 = vunpack.c.l.b16 %v1263
        %v1304 = vunpack.c.l.b16 %v1264
        %v1305 = vunpack.c.l.b16 %v1265
        %v1306 = vunpack.c.l.b16 %v1266
        %v1307 = vunpack.c.l.b16 %v1267
        %v1308 = vunpack.c.l.b16 %v1268
        %v1309 = vunpack.c.l.b16 %v1269
        %v1310 = vunpack.c.l.b16 %v1270
        %v1311 = vunpack.c.l.b16 %v1271
        %v1312 = vpack.c.b16 %v1297, %v1296
        %v1313 = vpack.c.b16 %v1299, %v1298
        %v1314 = vpack.c.b16 %v1301, %v1300
        %v1315 = vpack.c.b16 %v1303, %v1302
        %v1316 = vpack.c.b16 %v1305, %v1304
        %v1317 = vpack.c.b16 %v1307, %v1306
        %v1318 = vpack.c.b16 %v1309, %v1308
        %v1319 = vpack.c.b16 %v1311, %v1310
        %1328 = vmatprep.subr.bf16.mxu0 0
        %1329 = vmatpush1.bf16.msra.mxu0 %v1319
        %1330 = vmatprep.subr.bf16.mxu0 0
        %1331 = vmatpush1.bf16.msra.mxu0 %v1318
        %1332 = vmatprep.subr.bf16.mxu0 0
        %1333 = vmatpush1.bf16.msra.mxu0 %v1317
        %1334 = vmatprep.subr.bf16.mxu0 0
        %1335 = vmatpush1.bf16.msra.mxu0 %v1316
        %1336 = vmatprep.subr.bf16.mxu0 0
        %1337 = vmatpush1.bf16.msra.mxu0 %v1315
        %1338 = vmatprep.subr.bf16.mxu0 0
        %1339 = vmatpush1.bf16.msra.mxu0 %v1314
        %1340 = vmatprep.subr.bf16.mxu0 0
        %1341 = vmatpush1.bf16.msra.mxu0 %v1313
        %1342 = vmatprep.subr.bf16.mxu0 0
        %1343 = vmatpush1.bf16.msra.mxu0 %v1312
        %1344 = vmatprep.subr.bf16.mxu0 0
        %1345 = vmatpush2.bf16.msra.mxu0 0
        %1346 = vmatprep.subr.bf16.mxu0 0
        %1347 = vmatpush2.bf16.msra.mxu0 0
        %1348 = vmatprep.subr.bf16.mxu0 0
        %1349 = vmatpush2.bf16.msra.mxu0 0
        %1350 = vmatprep.subr.bf16.mxu0 0
        %1351 = vmatpush2.bf16.msra.mxu0 0
        %1352 = vmatprep.subr.bf16.mxu0 0
        %1353 = vmatpush2.bf16.msra.mxu0 0
        %1354 = vmatprep.subr.bf16.mxu0 0
        %1355 = vmatpush2.bf16.msra.mxu0 0
        %1356 = vmatprep.subr.bf16.mxu0 0
        %1357 = vmatpush2.bf16.msra.mxu0 0
        %1358 = vmatprep.subr.bf16.mxu0 0
        %1359 = vmatpush2.bf16.msra.mxu0 0
        %1360 = vmatprep.mubr.bf16.mxu0 0
        %1361 = vmatmul.mubr.bf16.gmra.mxu0 %v1247
        %v1362 = vpop.f32.mrf.mxu0
        %v1363 = vadd.f32 %v1278, %v1362
        %v1364 = vpop.f32.mrf.mxu0
        %v1365 = vpop.f32.mrf.mxu0
        %v1366 = vadd.f32 %v1278, %v1365
        %v1367 = vpop.f32.mrf.mxu0
        %1368 = vmatprep.mubr.bf16.mxu0 0
        %1369 = vmatmul.mubr.bf16.gmra.mxu0 %v1248
        %v1370 = vpop.f32.mrf.mxu0
        %v1371 = vadd.f32 %v1278, %v1370
        %v1372 = vpop.f32.mrf.mxu0
        %v1373 = vpop.f32.mrf.mxu0
        %v1374 = vadd.f32 %v1278, %v1373
        %v1375 = vpop.f32.mrf.mxu0
        %1376 = vmatprep.mubr.bf16.mxu0 0
        %1377 = vmatmul.mubr.bf16.gmra.mxu0 %v1249
        %v1378 = vpop.f32.mrf.mxu0
        %v1379 = vadd.f32 %v1278, %v1378
        %v1380 = vpop.f32.mrf.mxu0
        %v1381 = vpop.f32.mrf.mxu0
        %v1382 = vadd.f32 %v1278, %v1381
        %v1383 = vpop.f32.mrf.mxu0
        %1384 = vmatprep.mubr.bf16.mxu0 0
        %1385 = vmatmul.mubr.bf16.gmra.mxu0 %v1250
        %v1386 = vpop.f32.mrf.mxu0
        %v1387 = vadd.f32 %v1278, %v1386
        %v1388 = vpop.f32.mrf.mxu0
        %v1389 = vpop.f32.mrf.mxu0
        %v1390 = vadd.f32 %v1278, %v1389
        %v1391 = vpop.f32.mrf.mxu0
        %1392 = vmatprep.mubr.bf16.mxu0 0
        %1393 = vmatmul.mubr.bf16.gmra.mxu0 %v1251
        %v1394 = vpop.f32.mrf.mxu0
        %v1395 = vadd.f32 %v1278, %v1394
        %v1396 = vpop.f32.mrf.mxu0
        %v1397 = vpop.f32.mrf.mxu0
        %v1398 = vadd.f32 %v1278, %v1397
        %v1399 = vpop.f32.mrf.mxu0
        %1400 = vmatprep.mubr.bf16.mxu0 0
        %1401 = vmatmul.mubr.bf16.gmra.mxu0 %v1252
        %v1402 = vpop.f32.mrf.mxu0
        %v1403 = vadd.f32 %v1278, %v1402
        %v1404 = vpop.f32.mrf.mxu0
        %v1405 = vpop.f32.mrf.mxu0
        %v1406 = vadd.f32 %v1278, %v1405
        %v1407 = vpop.f32.mrf.mxu0
        %1408 = vmatprep.mubr.bf16.mxu0 0
        %1409 = vmatmul.mubr.bf16.gmra.mxu0 %v1253
        %v1410 = vpop.f32.mrf.mxu0
        %v1411 = vadd.f32 %v1278, %v1410
        %v1412 = vpop.f32.mrf.mxu0
        %v1413 = vpop.f32.mrf.mxu0
        %v1414 = vadd.f32 %v1278, %v1413
        %v1415 = vpop.f32.mrf.mxu0
        %1416 = vmatprep.mubr.bf16.mxu0 0
        %1417 = vmatmul.mubr.bf16.gmra.mxu0 %v1254
        %v1418 = vpop.f32.mrf.mxu0
        %v1419 = vadd.f32 %v1278, %v1418
        %v1420 = vpop.f32.mrf.mxu0
        %v1421 = vpop.f32.mrf.mxu0
        %v1422 = vadd.f32 %v1278, %v1421
        %v1423 = vpop.f32.mrf.mxu0
        %1424 = vdwg.mxu0
        %v1425 = vmax.f32 %v1363, 0.0
        %v1426 = vmax.f32 %v1366, 0.0
        %v1427 = vmax.f32 %v1371, 0.0
        %v1428 = vmax.f32 %v1374, 0.0
        %v1429 = vmax.f32 %v1379, 0.0
        %v1430 = vmax.f32 %v1382, 0.0
        %v1431 = vmax.f32 %v1387, 0.0
        %v1432 = vmax.f32 %v1390, 0.0
        %v1433 = vmax.f32 %v1395, 0.0
        %v1434 = vmax.f32 %v1398, 0.0
        %v1435 = vmax.f32 %v1403, 0.0
        %v1436 = vmax.f32 %v1406, 0.0
        %v1437 = vmax.f32 %v1411, 0.0
        %v1438 = vmax.f32 %v1414, 0.0
        %v1439 = vmax.f32 %v1419, 0.0
        %v1440 = vmax.f32 %v1422, 0.0
        %v1441 = vpack.c.bf16 %v1426, %v1425
        %v1442 = vpack.c.bf16 %v1428, %v1427
        %v1443 = vpack.c.bf16 %v1430, %v1429
        %v1444 = vpack.c.bf16 %v1432, %v1431
        %v1445 = vpack.c.bf16 %v1434, %v1433
        %v1446 = vpack.c.bf16 %v1436, %v1435
        %v1447 = vpack.c.bf16 %v1438, %v1437
        %v1448 = vpack.c.bf16 %v1440, %v1439
        %s1449 = scalar_lea.vmem [#allocation2], 320
        %v1450 = vld [vmem:[%s1449] sm:$0xf]
        %v1451 = vld [vmem:[%s1449 + $0x4] sm:$0xf]
        %v1452 = vld [vmem:[%s1449 + $0x8] sm:$0xf]
        %v1453 = vld [vmem:[%s1449 + $0xc] sm:$0xf]
        %v1454 = vld [vmem:[%s1449 + $0x10] sm:$0xf]
        %v1455 = vld [vmem:[%s1449 + $0x14] sm:$0xf]
        %v1456 = vld [vmem:[%s1449 + $0x18] sm:$0xf]
        %v1457 = vld [vmem:[%s1449 + $0x1c] sm:$0xf]
        %v1458 = vld [vmem:[%s1449 + $0x20] sm:$0xf]
        %v1459 = vld [vmem:[%s1449 + $0x24] sm:$0xf]
        %v1460 = vld [vmem:[%s1449 + $0x28] sm:$0xf]
        %v1461 = vld [vmem:[%s1449 + $0x2c] sm:$0xf]
        %v1462 = vld [vmem:[%s1449 + $0x30] sm:$0xf]
        %v1463 = vld [vmem:[%s1449 + $0x34] sm:$0xf]
        %v1464 = vld [vmem:[%s1449 + $0x38] sm:$0xf]
        %v1465 = vld [vmem:[%s1449 + $0x3c] sm:$0xf]
        %s1466 = scalar_lea.vmem %s4, 5
        %v1467 = vld [vmem:[%s1466] sm:$0x1]
        %v1469 = vlaneseq
        %v1470 = vshrl.u32 %v1469, 7
        %v1471 = vsub.s32 0, %v1470
        %v1472 = vrot.slane %v1467, %v1471
        %v1490 = vunpack.c.l.b16 %v1450
        %v1491 = vunpack.c.l.b16 %v1451
        %v1492 = vunpack.c.l.b16 %v1452
        %v1493 = vunpack.c.l.b16 %v1453
        %v1494 = vunpack.c.l.b16 %v1454
        %v1495 = vunpack.c.l.b16 %v1455
        %v1496 = vunpack.c.l.b16 %v1456
        %v1497 = vunpack.c.l.b16 %v1457
        %v1498 = vunpack.c.l.b16 %v1458
        %v1499 = vunpack.c.l.b16 %v1459
        %v1500 = vunpack.c.l.b16 %v1460
        %v1501 = vunpack.c.l.b16 %v1461
        %v1502 = vunpack.c.l.b16 %v1462
        %v1503 = vunpack.c.l.b16 %v1463
        %v1504 = vunpack.c.l.b16 %v1464
        %v1505 = vunpack.c.l.b16 %v1465
        %v1506 = vpack.c.b16 %v1491, %v1490
        %v1507 = vpack.c.b16 %v1493, %v1492
        %v1508 = vpack.c.b16 %v1495, %v1494
        %v1509 = vpack.c.b16 %v1497, %v1496
        %v1510 = vpack.c.b16 %v1499, %v1498
        %v1511 = vpack.c.b16 %v1501, %v1500
        %v1512 = vpack.c.b16 %v1503, %v1502
        %v1513 = vpack.c.b16 %v1505, %v1504
        %1522 = vmatprep.subr.bf16.mxu0 0
        %1523 = vmatpush1.bf16.msra.mxu0 %v1513
        %1524 = vmatprep.subr.bf16.mxu0 0
        %1525 = vmatpush1.bf16.msra.mxu0 %v1512
        %1526 = vmatprep.subr.bf16.mxu0 0
        %1527 = vmatpush1.bf16.msra.mxu0 %v1511
        %1528 = vmatprep.subr.bf16.mxu0 0
        %1529 = vmatpush1.bf16.msra.mxu0 %v1510
        %1530 = vmatprep.subr.bf16.mxu0 0
        %1531 = vmatpush1.bf16.msra.mxu0 %v1509
        %1532 = vmatprep.subr.bf16.mxu0 0
        %1533 = vmatpush1.bf16.msra.mxu0 %v1508
        %1534 = vmatprep.subr.bf16.mxu0 0
        %1535 = vmatpush1.bf16.msra.mxu0 %v1507
        %1536 = vmatprep.subr.bf16.mxu0 0
        %1537 = vmatpush1.bf16.msra.mxu0 %v1506
        %1538 = vmatprep.subr.bf16.mxu0 0
        %1539 = vmatpush2.bf16.msra.mxu0 0
        %1540 = vmatprep.subr.bf16.mxu0 0
        %1541 = vmatpush2.bf16.msra.mxu0 0
        %1542 = vmatprep.subr.bf16.mxu0 0
        %1543 = vmatpush2.bf16.msra.mxu0 0
        %1544 = vmatprep.subr.bf16.mxu0 0
        %1545 = vmatpush2.bf16.msra.mxu0 0
        %1546 = vmatprep.subr.bf16.mxu0 0
        %1547 = vmatpush2.bf16.msra.mxu0 0
        %1548 = vmatprep.subr.bf16.mxu0 0
        %1549 = vmatpush2.bf16.msra.mxu0 0
        %1550 = vmatprep.subr.bf16.mxu0 0
        %1551 = vmatpush2.bf16.msra.mxu0 0
        %1552 = vmatprep.subr.bf16.mxu0 0
        %1553 = vmatpush2.bf16.msra.mxu0 0
        %1554 = vmatprep.mubr.bf16.mxu0 0
        %1555 = vmatmul.mubr.bf16.gmra.mxu0 %v1441
        %v1556 = vpop.f32.mrf.mxu0
        %v1557 = vadd.f32 %v1472, %v1556
        %v1558 = vpop.f32.mrf.mxu0
        %v1559 = vpop.f32.mrf.mxu0
        %v1560 = vadd.f32 %v1472, %v1559
        %v1561 = vpop.f32.mrf.mxu0
        %1562 = vmatprep.mubr.bf16.mxu0 0
        %1563 = vmatmul.mubr.bf16.gmra.mxu0 %v1442
        %v1564 = vpop.f32.mrf.mxu0
        %v1565 = vadd.f32 %v1472, %v1564
        %v1566 = vpop.f32.mrf.mxu0
        %v1567 = vpop.f32.mrf.mxu0
        %v1568 = vadd.f32 %v1472, %v1567
        %v1569 = vpop.f32.mrf.mxu0
        %1570 = vmatprep.mubr.bf16.mxu0 0
        %1571 = vmatmul.mubr.bf16.gmra.mxu0 %v1443
        %v1572 = vpop.f32.mrf.mxu0
        %v1573 = vadd.f32 %v1472, %v1572
        %v1574 = vpop.f32.mrf.mxu0
        %v1575 = vpop.f32.mrf.mxu0
        %v1576 = vadd.f32 %v1472, %v1575
        %v1577 = vpop.f32.mrf.mxu0
        %1578 = vmatprep.mubr.bf16.mxu0 0
        %1579 = vmatmul.mubr.bf16.gmra.mxu0 %v1444
        %v1580 = vpop.f32.mrf.mxu0
        %v1581 = vadd.f32 %v1472, %v1580
        %v1582 = vpop.f32.mrf.mxu0
        %v1583 = vpop.f32.mrf.mxu0
        %v1584 = vadd.f32 %v1472, %v1583
        %v1585 = vpop.f32.mrf.mxu0
        %1586 = vmatprep.mubr.bf16.mxu0 0
        %1587 = vmatmul.mubr.bf16.gmra.mxu0 %v1445
        %v1588 = vpop.f32.mrf.mxu0
        %v1589 = vadd.f32 %v1472, %v1588
        %v1590 = vpop.f32.mrf.mxu0
        %v1591 = vpop.f32.mrf.mxu0
        %v1592 = vadd.f32 %v1472, %v1591
        %v1593 = vpop.f32.mrf.mxu0
        %1594 = vmatprep.mubr.bf16.mxu0 0
        %1595 = vmatmul.mubr.bf16.gmra.mxu0 %v1446
        %v1596 = vpop.f32.mrf.mxu0
        %v1597 = vadd.f32 %v1472, %v1596
        %v1598 = vpop.f32.mrf.mxu0
        %v1599 = vpop.f32.mrf.mxu0
        %v1600 = vadd.f32 %v1472, %v1599
        %v1601 = vpop.f32.mrf.mxu0
        %1602 = vmatprep.mubr.bf16.mxu0 0
        %1603 = vmatmul.mubr.bf16.gmra.mxu0 %v1447
        %v1604 = vpop.f32.mrf.mxu0
        %v1605 = vadd.f32 %v1472, %v1604
        %v1606 = vpop.f32.mrf.mxu0
        %v1607 = vpop.f32.mrf.mxu0
        %v1608 = vadd.f32 %v1472, %v1607
        %v1609 = vpop.f32.mrf.mxu0
        %1610 = vmatprep.mubr.bf16.mxu0 0
        %1611 = vmatmul.mubr.bf16.gmra.mxu0 %v1448
        %v1612 = vpop.f32.mrf.mxu0
        %v1613 = vadd.f32 %v1472, %v1612
        %v1614 = vpop.f32.mrf.mxu0
        %v1615 = vpop.f32.mrf.mxu0
        %v1616 = vadd.f32 %v1472, %v1615
        %v1617 = vpop.f32.mrf.mxu0
        %1618 = vdwg.mxu0
        %v1619 = vmax.f32 %v1557, 0.0
        %v1620 = vmax.f32 %v1560, 0.0
        %v1621 = vmax.f32 %v1565, 0.0
        %v1622 = vmax.f32 %v1568, 0.0
        %v1623 = vmax.f32 %v1573, 0.0
        %v1624 = vmax.f32 %v1576, 0.0
        %v1625 = vmax.f32 %v1581, 0.0
        %v1626 = vmax.f32 %v1584, 0.0
        %v1627 = vmax.f32 %v1589, 0.0
        %v1628 = vmax.f32 %v1592, 0.0
        %v1629 = vmax.f32 %v1597, 0.0
        %v1630 = vmax.f32 %v1600, 0.0
        %v1631 = vmax.f32 %v1605, 0.0
        %v1632 = vmax.f32 %v1608, 0.0
        %v1633 = vmax.f32 %v1613, 0.0
        %v1634 = vmax.f32 %v1616, 0.0
        %v1635 = vpack.c.bf16 %v1620, %v1619
        %v1636 = vpack.c.bf16 %v1622, %v1621
        %v1637 = vpack.c.bf16 %v1624, %v1623
        %v1638 = vpack.c.bf16 %v1626, %v1625
        %v1639 = vpack.c.bf16 %v1628, %v1627
        %v1640 = vpack.c.bf16 %v1630, %v1629
        %v1641 = vpack.c.bf16 %v1632, %v1631
        %v1642 = vpack.c.bf16 %v1634, %v1633
        %s1643 = scalar_lea.vmem [#allocation2], 384
        %v1644 = vld [vmem:[%s1643] sm:$0xf]
        %v1645 = vld [vmem:[%s1643 + $0x4] sm:$0xf]
        %v1646 = vld [vmem:[%s1643 + $0x8] sm:$0xf]
        %v1647 = vld [vmem:[%s1643 + $0xc] sm:$0xf]
        %v1648 = vld [vmem:[%s1643 + $0x10] sm:$0xf]
        %v1649 = vld [vmem:[%s1643 + $0x14] sm:$0xf]
        %v1650 = vld [vmem:[%s1643 + $0x18] sm:$0xf]
        %v1651 = vld [vmem:[%s1643 + $0x1c] sm:$0xf]
        %v1652 = vld [vmem:[%s1643 + $0x20] sm:$0xf]
        %v1653 = vld [vmem:[%s1643 + $0x24] sm:$0xf]
        %v1654 = vld [vmem:[%s1643 + $0x28] sm:$0xf]
        %v1655 = vld [vmem:[%s1643 + $0x2c] sm:$0xf]
        %v1656 = vld [vmem:[%s1643 + $0x30] sm:$0xf]
        %v1657 = vld [vmem:[%s1643 + $0x34] sm:$0xf]
        %v1658 = vld [vmem:[%s1643 + $0x38] sm:$0xf]
        %v1659 = vld [vmem:[%s1643 + $0x3c] sm:$0xf]
        %s1660 = scalar_lea.vmem %s4, 6
        %v1661 = vld [vmem:[%s1660] sm:$0x1]
        %v1663 = vlaneseq
        %v1664 = vshrl.u32 %v1663, 7
        %v1665 = vsub.s32 0, %v1664
        %v1666 = vrot.slane %v1661, %v1665
        %v1684 = vunpack.c.l.b16 %v1644
        %v1685 = vunpack.c.l.b16 %v1645
        %v1686 = vunpack.c.l.b16 %v1646
        %v1687 = vunpack.c.l.b16 %v1647
        %v1688 = vunpack.c.l.b16 %v1648
        %v1689 = vunpack.c.l.b16 %v1649
        %v1690 = vunpack.c.l.b16 %v1650
        %v1691 = vunpack.c.l.b16 %v1651
        %v1692 = vunpack.c.l.b16 %v1652
        %v1693 = vunpack.c.l.b16 %v1653
        %v1694 = vunpack.c.l.b16 %v1654
        %v1695 = vunpack.c.l.b16 %v1655
        %v1696 = vunpack.c.l.b16 %v1656
        %v1697 = vunpack.c.l.b16 %v1657
        %v1698 = vunpack.c.l.b16 %v1658
        %v1699 = vunpack.c.l.b16 %v1659
        %v1700 = vpack.c.b16 %v1685, %v1684
        %v1701 = vpack.c.b16 %v1687, %v1686
        %v1702 = vpack.c.b16 %v1689, %v1688
        %v1703 = vpack.c.b16 %v1691, %v1690
        %v1704 = vpack.c.b16 %v1693, %v1692
        %v1705 = vpack.c.b16 %v1695, %v1694
        %v1706 = vpack.c.b16 %v1697, %v1696
        %v1707 = vpack.c.b16 %v1699, %v1698
        %1716 = vmatprep.subr.bf16.mxu0 0
        %1717 = vmatpush1.bf16.msra.mxu0 %v1707
        %1718 = vmatprep.subr.bf16.mxu0 0
        %1719 = vmatpush1.bf16.msra.mxu0 %v1706
        %1720 = vmatprep.subr.bf16.mxu0 0
        %1721 = vmatpush1.bf16.msra.mxu0 %v1705
        %1722 = vmatprep.subr.bf16.mxu0 0
        %1723 = vmatpush1.bf16.msra.mxu0 %v1704
        %1724 = vmatprep.subr.bf16.mxu0 0
        %1725 = vmatpush1.bf16.msra.mxu0 %v1703
        %1726 = vmatprep.subr.bf16.mxu0 0
        %1727 = vmatpush1.bf16.msra.mxu0 %v1702
        %1728 = vmatprep.subr.bf16.mxu0 0
        %1729 = vmatpush1.bf16.msra.mxu0 %v1701
        %1730 = vmatprep.subr.bf16.mxu0 0
        %1731 = vmatpush1.bf16.msra.mxu0 %v1700
        %1732 = vmatprep.subr.bf16.mxu0 0
        %1733 = vmatpush2.bf16.msra.mxu0 0
        %1734 = vmatprep.subr.bf16.mxu0 0
        %1735 = vmatpush2.bf16.msra.mxu0 0
        %1736 = vmatprep.subr.bf16.mxu0 0
        %1737 = vmatpush2.bf16.msra.mxu0 0
        %1738 = vmatprep.subr.bf16.mxu0 0
        %1739 = vmatpush2.bf16.msra.mxu0 0
        %1740 = vmatprep.subr.bf16.mxu0 0
        %1741 = vmatpush2.bf16.msra.mxu0 0
        %1742 = vmatprep.subr.bf16.mxu0 0
        %1743 = vmatpush2.bf16.msra.mxu0 0
        %1744 = vmatprep.subr.bf16.mxu0 0
        %1745 = vmatpush2.bf16.msra.mxu0 0
        %1746 = vmatprep.subr.bf16.mxu0 0
        %1747 = vmatpush2.bf16.msra.mxu0 0
        %1748 = vmatprep.mubr.bf16.mxu0 0
        %1749 = vmatmul.mubr.bf16.gmra.mxu0 %v1635
        %v1750 = vpop.f32.mrf.mxu0
        %v1751 = vadd.f32 %v1666, %v1750
        %v1752 = vpop.f32.mrf.mxu0
        %v1753 = vpop.f32.mrf.mxu0
        %v1754 = vadd.f32 %v1666, %v1753
        %v1755 = vpop.f32.mrf.mxu0
        %1756 = vmatprep.mubr.bf16.mxu0 0
        %1757 = vmatmul.mubr.bf16.gmra.mxu0 %v1636
        %v1758 = vpop.f32.mrf.mxu0
        %v1759 = vadd.f32 %v1666, %v1758
        %v1760 = vpop.f32.mrf.mxu0
        %v1761 = vpop.f32.mrf.mxu0
        %v1762 = vadd.f32 %v1666, %v1761
        %v1763 = vpop.f32.mrf.mxu0
        %1764 = vmatprep.mubr.bf16.mxu0 0
        %1765 = vmatmul.mubr.bf16.gmra.mxu0 %v1637
        %v1766 = vpop.f32.mrf.mxu0
        %v1767 = vadd.f32 %v1666, %v1766
        %v1768 = vpop.f32.mrf.mxu0
        %v1769 = vpop.f32.mrf.mxu0
        %v1770 = vadd.f32 %v1666, %v1769
        %v1771 = vpop.f32.mrf.mxu0
        %1772 = vmatprep.mubr.bf16.mxu0 0
        %1773 = vmatmul.mubr.bf16.gmra.mxu0 %v1638
        %v1774 = vpop.f32.mrf.mxu0
        %v1775 = vadd.f32 %v1666, %v1774
        %v1776 = vpop.f32.mrf.mxu0
        %v1777 = vpop.f32.mrf.mxu0
        %v1778 = vadd.f32 %v1666, %v1777
        %v1779 = vpop.f32.mrf.mxu0
        %1780 = vmatprep.mubr.bf16.mxu0 0
        %1781 = vmatmul.mubr.bf16.gmra.mxu0 %v1639
        %v1782 = vpop.f32.mrf.mxu0
        %v1783 = vadd.f32 %v1666, %v1782
        %v1784 = vpop.f32.mrf.mxu0
        %v1785 = vpop.f32.mrf.mxu0
        %v1786 = vadd.f32 %v1666, %v1785
        %v1787 = vpop.f32.mrf.mxu0
        %1788 = vmatprep.mubr.bf16.mxu0 0
        %1789 = vmatmul.mubr.bf16.gmra.mxu0 %v1640
        %v1790 = vpop.f32.mrf.mxu0
        %v1791 = vadd.f32 %v1666, %v1790
        %v1792 = vpop.f32.mrf.mxu0
        %v1793 = vpop.f32.mrf.mxu0
        %v1794 = vadd.f32 %v1666, %v1793
        %v1795 = vpop.f32.mrf.mxu0
        %1796 = vmatprep.mubr.bf16.mxu0 0
        %1797 = vmatmul.mubr.bf16.gmra.mxu0 %v1641
        %v1798 = vpop.f32.mrf.mxu0
        %v1799 = vadd.f32 %v1666, %v1798
        %v1800 = vpop.f32.mrf.mxu0
        %v1801 = vpop.f32.mrf.mxu0
        %v1802 = vadd.f32 %v1666, %v1801
        %v1803 = vpop.f32.mrf.mxu0
        %1804 = vmatprep.mubr.bf16.mxu0 0
        %1805 = vmatmul.mubr.bf16.gmra.mxu0 %v1642
        %v1806 = vpop.f32.mrf.mxu0
        %v1807 = vadd.f32 %v1666, %v1806
        %v1808 = vpop.f32.mrf.mxu0
        %v1809 = vpop.f32.mrf.mxu0
        %v1810 = vadd.f32 %v1666, %v1809
        %v1811 = vpop.f32.mrf.mxu0
        %1812 = vdwg.mxu0
        %v1813 = vmax.f32 %v1751, 0.0
        %v1814 = vmax.f32 %v1754, 0.0
        %v1815 = vmax.f32 %v1759, 0.0
        %v1816 = vmax.f32 %v1762, 0.0
        %v1817 = vmax.f32 %v1767, 0.0
        %v1818 = vmax.f32 %v1770, 0.0
        %v1819 = vmax.f32 %v1775, 0.0
        %v1820 = vmax.f32 %v1778, 0.0
        %v1821 = vmax.f32 %v1783, 0.0
        %v1822 = vmax.f32 %v1786, 0.0
        %v1823 = vmax.f32 %v1791, 0.0
        %v1824 = vmax.f32 %v1794, 0.0
        %v1825 = vmax.f32 %v1799, 0.0
        %v1826 = vmax.f32 %v1802, 0.0
        %v1827 = vmax.f32 %v1807, 0.0
        %v1828 = vmax.f32 %v1810, 0.0
        %v1829 = vpack.c.bf16 %v1814, %v1813
        %v1830 = vpack.c.bf16 %v1816, %v1815
        %v1831 = vpack.c.bf16 %v1818, %v1817
        %v1832 = vpack.c.bf16 %v1820, %v1819
        %v1833 = vpack.c.bf16 %v1822, %v1821
        %v1834 = vpack.c.bf16 %v1824, %v1823
        %v1835 = vpack.c.bf16 %v1826, %v1825
        %v1836 = vpack.c.bf16 %v1828, %v1827
        %s1837 = scalar_lea.vmem [#allocation2], 448
        %v1838 = vld [vmem:[%s1837] sm:$0xf]
        %v1839 = vld [vmem:[%s1837 + $0x4] sm:$0xf]
        %v1840 = vld [vmem:[%s1837 + $0x8] sm:$0xf]
        %v1841 = vld [vmem:[%s1837 + $0xc] sm:$0xf]
        %v1842 = vld [vmem:[%s1837 + $0x10] sm:$0xf]
        %v1843 = vld [vmem:[%s1837 + $0x14] sm:$0xf]
        %v1844 = vld [vmem:[%s1837 + $0x18] sm:$0xf]
        %v1845 = vld [vmem:[%s1837 + $0x1c] sm:$0xf]
        %v1846 = vld [vmem:[%s1837 + $0x20] sm:$0xf]
        %v1847 = vld [vmem:[%s1837 + $0x24] sm:$0xf]
        %v1848 = vld [vmem:[%s1837 + $0x28] sm:$0xf]
        %v1849 = vld [vmem:[%s1837 + $0x2c] sm:$0xf]
        %v1850 = vld [vmem:[%s1837 + $0x30] sm:$0xf]
        %v1851 = vld [vmem:[%s1837 + $0x34] sm:$0xf]
        %v1852 = vld [vmem:[%s1837 + $0x38] sm:$0xf]
        %v1853 = vld [vmem:[%s1837 + $0x3c] sm:$0xf]
        %s1854 = scalar_lea.vmem %s4, 7
        %v1855 = vld [vmem:[%s1854] sm:$0x1]
        %v1857 = vlaneseq
        %v1858 = vshrl.u32 %v1857, 7
        %v1859 = vsub.s32 0, %v1858
        %v1860 = vrot.slane %v1855, %v1859
        %v1878 = vunpack.c.l.b16 %v1838
        %v1879 = vunpack.c.l.b16 %v1839
        %v1880 = vunpack.c.l.b16 %v1840
        %v1881 = vunpack.c.l.b16 %v1841
        %v1882 = vunpack.c.l.b16 %v1842
        %v1883 = vunpack.c.l.b16 %v1843
        %v1884 = vunpack.c.l.b16 %v1844
        %v1885 = vunpack.c.l.b16 %v1845
        %v1886 = vunpack.c.l.b16 %v1846
        %v1887 = vunpack.c.l.b16 %v1847
        %v1888 = vunpack.c.l.b16 %v1848
        %v1889 = vunpack.c.l.b16 %v1849
        %v1890 = vunpack.c.l.b16 %v1850
        %v1891 = vunpack.c.l.b16 %v1851
        %v1892 = vunpack.c.l.b16 %v1852
        %v1893 = vunpack.c.l.b16 %v1853
        %v1894 = vpack.c.b16 %v1879, %v1878
        %v1895 = vpack.c.b16 %v1881, %v1880
        %v1896 = vpack.c.b16 %v1883, %v1882
        %v1897 = vpack.c.b16 %v1885, %v1884
        %v1898 = vpack.c.b16 %v1887, %v1886
        %v1899 = vpack.c.b16 %v1889, %v1888
        %v1900 = vpack.c.b16 %v1891, %v1890
        %v1901 = vpack.c.b16 %v1893, %v1892
        %1910 = vmatprep.subr.bf16.mxu0 0
        %1911 = vmatpush1.bf16.msra.mxu0 %v1901
        %1912 = vmatprep.subr.bf16.mxu0 0
        %1913 = vmatpush1.bf16.msra.mxu0 %v1900
        %1914 = vmatprep.subr.bf16.mxu0 0
        %1915 = vmatpush1.bf16.msra.mxu0 %v1899
        %1916 = vmatprep.subr.bf16.mxu0 0
        %1917 = vmatpush1.bf16.msra.mxu0 %v1898
        %1918 = vmatprep.subr.bf16.mxu0 0
        %1919 = vmatpush1.bf16.msra.mxu0 %v1897
        %1920 = vmatprep.subr.bf16.mxu0 0
        %1921 = vmatpush1.bf16.msra.mxu0 %v1896
        %1922 = vmatprep.subr.bf16.mxu0 0
        %1923 = vmatpush1.bf16.msra.mxu0 %v1895
        %1924 = vmatprep.subr.bf16.mxu0 0
        %1925 = vmatpush1.bf16.msra.mxu0 %v1894
        %1926 = vmatprep.subr.bf16.mxu0 0
        %1927 = vmatpush2.bf16.msra.mxu0 0
        %1928 = vmatprep.subr.bf16.mxu0 0
        %1929 = vmatpush2.bf16.msra.mxu0 0
        %1930 = vmatprep.subr.bf16.mxu0 0
        %1931 = vmatpush2.bf16.msra.mxu0 0
        %1932 = vmatprep.subr.bf16.mxu0 0
        %1933 = vmatpush2.bf16.msra.mxu0 0
        %1934 = vmatprep.subr.bf16.mxu0 0
        %1935 = vmatpush2.bf16.msra.mxu0 0
        %1936 = vmatprep.subr.bf16.mxu0 0
        %1937 = vmatpush2.bf16.msra.mxu0 0
        %1938 = vmatprep.subr.bf16.mxu0 0
        %1939 = vmatpush2.bf16.msra.mxu0 0
        %1940 = vmatprep.subr.bf16.mxu0 0
        %1941 = vmatpush2.bf16.msra.mxu0 0
        %1942 = vmatprep.mubr.bf16.mxu0 0
        %1943 = vmatmul.mubr.bf16.gmra.mxu0 %v1829
        %v1944 = vpop.f32.mrf.mxu0
        %v1945 = vadd.f32 %v1860, %v1944
        %v1946 = vpop.f32.mrf.mxu0
        %v1947 = vpop.f32.mrf.mxu0
        %v1948 = vadd.f32 %v1860, %v1947
        %v1949 = vpop.f32.mrf.mxu0
        %1950 = vmatprep.mubr.bf16.mxu0 0
        %1951 = vmatmul.mubr.bf16.gmra.mxu0 %v1830
        %v1952 = vpop.f32.mrf.mxu0
        %v1953 = vadd.f32 %v1860, %v1952
        %v1954 = vpop.f32.mrf.mxu0
        %v1955 = vpop.f32.mrf.mxu0
        %v1956 = vadd.f32 %v1860, %v1955
        %v1957 = vpop.f32.mrf.mxu0
        %1958 = vmatprep.mubr.bf16.mxu0 0
        %1959 = vmatmul.mubr.bf16.gmra.mxu0 %v1831
        %v1960 = vpop.f32.mrf.mxu0
        %v1961 = vadd.f32 %v1860, %v1960
        %v1962 = vpop.f32.mrf.mxu0
        %v1963 = vpop.f32.mrf.mxu0
        %v1964 = vadd.f32 %v1860, %v1963
        %v1965 = vpop.f32.mrf.mxu0
        %1966 = vmatprep.mubr.bf16.mxu0 0
        %1967 = vmatmul.mubr.bf16.gmra.mxu0 %v1832
        %v1968 = vpop.f32.mrf.mxu0
        %v1969 = vadd.f32 %v1860, %v1968
        %v1970 = vpop.f32.mrf.mxu0
        %v1971 = vpop.f32.mrf.mxu0
        %v1972 = vadd.f32 %v1860, %v1971
        %v1973 = vpop.f32.mrf.mxu0
        %1974 = vmatprep.mubr.bf16.mxu0 0
        %1975 = vmatmul.mubr.bf16.gmra.mxu0 %v1833
        %v1976 = vpop.f32.mrf.mxu0
        %v1977 = vadd.f32 %v1860, %v1976
        %v1978 = vpop.f32.mrf.mxu0
        %v1979 = vpop.f32.mrf.mxu0
        %v1980 = vadd.f32 %v1860, %v1979
        %v1981 = vpop.f32.mrf.mxu0
        %1982 = vmatprep.mubr.bf16.mxu0 0
        %1983 = vmatmul.mubr.bf16.gmra.mxu0 %v1834
        %v1984 = vpop.f32.mrf.mxu0
        %v1985 = vadd.f32 %v1860, %v1984
        %v1986 = vpop.f32.mrf.mxu0
        %v1987 = vpop.f32.mrf.mxu0
        %v1988 = vadd.f32 %v1860, %v1987
        %v1989 = vpop.f32.mrf.mxu0
        %1990 = vmatprep.mubr.bf16.mxu0 0
        %1991 = vmatmul.mubr.bf16.gmra.mxu0 %v1835
        %v1992 = vpop.f32.mrf.mxu0
        %v1993 = vadd.f32 %v1860, %v1992
        %v1994 = vpop.f32.mrf.mxu0
        %v1995 = vpop.f32.mrf.mxu0
        %v1996 = vadd.f32 %v1860, %v1995
        %v1997 = vpop.f32.mrf.mxu0
        %1998 = vmatprep.mubr.bf16.mxu0 0
        %1999 = vmatmul.mubr.bf16.gmra.mxu0 %v1836
        %v2000 = vpop.f32.mrf.mxu0
        %v2001 = vadd.f32 %v1860, %v2000
        %v2002 = vpop.f32.mrf.mxu0
        %v2003 = vpop.f32.mrf.mxu0
        %v2004 = vadd.f32 %v1860, %v2003
        %v2005 = vpop.f32.mrf.mxu0
        %2006 = vdwg.mxu0
        %v2007 = vmax.f32 %v1945, 0.0
        %v2008 = vmax.f32 %v1948, 0.0
        %v2009 = vmax.f32 %v1953, 0.0
        %v2010 = vmax.f32 %v1956, 0.0
        %v2011 = vmax.f32 %v1961, 0.0
        %v2012 = vmax.f32 %v1964, 0.0
        %v2013 = vmax.f32 %v1969, 0.0
        %v2014 = vmax.f32 %v1972, 0.0
        %v2015 = vmax.f32 %v1977, 0.0
        %v2016 = vmax.f32 %v1980, 0.0
        %v2017 = vmax.f32 %v1985, 0.0
        %v2018 = vmax.f32 %v1988, 0.0
        %v2019 = vmax.f32 %v1993, 0.0
        %v2020 = vmax.f32 %v1996, 0.0
        %v2021 = vmax.f32 %v2001, 0.0
        %v2022 = vmax.f32 %v2004, 0.0
        %v2023 = vpack.c.bf16 %v2008, %v2007
        %v2024 = vpack.c.bf16 %v2010, %v2009
        %v2025 = vpack.c.bf16 %v2012, %v2011
        %v2026 = vpack.c.bf16 %v2014, %v2013
        %v2027 = vpack.c.bf16 %v2016, %v2015
        %v2028 = vpack.c.bf16 %v2018, %v2017
        %v2029 = vpack.c.bf16 %v2020, %v2019
        %v2030 = vpack.c.bf16 %v2022, %v2021
        %s2031 = scalar_lea.vmem [#allocation2], 512
        %v2032 = vld [vmem:[%s2031] sm:$0xf]
        %v2033 = vld [vmem:[%s2031 + $0x4] sm:$0xf]
        %v2034 = vld [vmem:[%s2031 + $0x8] sm:$0xf]
        %v2035 = vld [vmem:[%s2031 + $0xc] sm:$0xf]
        %v2036 = vld [vmem:[%s2031 + $0x10] sm:$0xf]
        %v2037 = vld [vmem:[%s2031 + $0x14] sm:$0xf]
        %v2038 = vld [vmem:[%s2031 + $0x18] sm:$0xf]
        %v2039 = vld [vmem:[%s2031 + $0x1c] sm:$0xf]
        %v2040 = vld [vmem:[%s2031 + $0x20] sm:$0xf]
        %v2041 = vld [vmem:[%s2031 + $0x24] sm:$0xf]
        %v2042 = vld [vmem:[%s2031 + $0x28] sm:$0xf]
        %v2043 = vld [vmem:[%s2031 + $0x2c] sm:$0xf]
        %v2044 = vld [vmem:[%s2031 + $0x30] sm:$0xf]
        %v2045 = vld [vmem:[%s2031 + $0x34] sm:$0xf]
        %v2046 = vld [vmem:[%s2031 + $0x38] sm:$0xf]
        %v2047 = vld [vmem:[%s2031 + $0x3c] sm:$0xf]
        %s2048 = scalar_lea.vmem %s4, 8
        %v2049 = vld [vmem:[%s2048] sm:$0x1]
        %v2051 = vlaneseq
        %v2052 = vshrl.u32 %v2051, 7
        %v2053 = vsub.s32 0, %v2052
        %v2054 = vrot.slane %v2049, %v2053
        %v2072 = vunpack.c.l.b16 %v2032
        %v2073 = vunpack.c.l.b16 %v2033
        %v2074 = vunpack.c.l.b16 %v2034
        %v2075 = vunpack.c.l.b16 %v2035
        %v2076 = vunpack.c.l.b16 %v2036
        %v2077 = vunpack.c.l.b16 %v2037
        %v2078 = vunpack.c.l.b16 %v2038
        %v2079 = vunpack.c.l.b16 %v2039
        %v2080 = vunpack.c.l.b16 %v2040
        %v2081 = vunpack.c.l.b16 %v2041
        %v2082 = vunpack.c.l.b16 %v2042
        %v2083 = vunpack.c.l.b16 %v2043
        %v2084 = vunpack.c.l.b16 %v2044
        %v2085 = vunpack.c.l.b16 %v2045
        %v2086 = vunpack.c.l.b16 %v2046
        %v2087 = vunpack.c.l.b16 %v2047
        %v2088 = vpack.c.b16 %v2073, %v2072
        %v2089 = vpack.c.b16 %v2075, %v2074
        %v2090 = vpack.c.b16 %v2077, %v2076
        %v2091 = vpack.c.b16 %v2079, %v2078
        %v2092 = vpack.c.b16 %v2081, %v2080
        %v2093 = vpack.c.b16 %v2083, %v2082
        %v2094 = vpack.c.b16 %v2085, %v2084
        %v2095 = vpack.c.b16 %v2087, %v2086
        %2104 = vmatprep.subr.bf16.mxu0 0
        %2105 = vmatpush1.bf16.msra.mxu0 %v2095
        %2106 = vmatprep.subr.bf16.mxu0 0
        %2107 = vmatpush1.bf16.msra.mxu0 %v2094
        %2108 = vmatprep.subr.bf16.mxu0 0
        %2109 = vmatpush1.bf16.msra.mxu0 %v2093
        %2110 = vmatprep.subr.bf16.mxu0 0
        %2111 = vmatpush1.bf16.msra.mxu0 %v2092
        %2112 = vmatprep.subr.bf16.mxu0 0
        %2113 = vmatpush1.bf16.msra.mxu0 %v2091
        %2114 = vmatprep.subr.bf16.mxu0 0
        %2115 = vmatpush1.bf16.msra.mxu0 %v2090
        %2116 = vmatprep.subr.bf16.mxu0 0
        %2117 = vmatpush1.bf16.msra.mxu0 %v2089
        %2118 = vmatprep.subr.bf16.mxu0 0
        %2119 = vmatpush1.bf16.msra.mxu0 %v2088
        %2120 = vmatprep.subr.bf16.mxu0 0
        %2121 = vmatpush2.bf16.msra.mxu0 0
        %2122 = vmatprep.subr.bf16.mxu0 0
        %2123 = vmatpush2.bf16.msra.mxu0 0
        %2124 = vmatprep.subr.bf16.mxu0 0
        %2125 = vmatpush2.bf16.msra.mxu0 0
        %2126 = vmatprep.subr.bf16.mxu0 0
        %2127 = vmatpush2.bf16.msra.mxu0 0
        %2128 = vmatprep.subr.bf16.mxu0 0
        %2129 = vmatpush2.bf16.msra.mxu0 0
        %2130 = vmatprep.subr.bf16.mxu0 0
        %2131 = vmatpush2.bf16.msra.mxu0 0
        %2132 = vmatprep.subr.bf16.mxu0 0
        %2133 = vmatpush2.bf16.msra.mxu0 0
        %2134 = vmatprep.subr.bf16.mxu0 0
        %2135 = vmatpush2.bf16.msra.mxu0 0
        %2136 = vmatprep.mubr.bf16.mxu0 0
        %2137 = vmatmul.mubr.bf16.gmra.mxu0 %v2023
        %v2138 = vpop.f32.mrf.mxu0
        %v2139 = vadd.f32 %v2054, %v2138
        %v2140 = vpop.f32.mrf.mxu0
        %v2141 = vpop.f32.mrf.mxu0
        %v2142 = vadd.f32 %v2054, %v2141
        %v2143 = vpop.f32.mrf.mxu0
        %2144 = vmatprep.mubr.bf16.mxu0 0
        %2145 = vmatmul.mubr.bf16.gmra.mxu0 %v2024
        %v2146 = vpop.f32.mrf.mxu0
        %v2147 = vadd.f32 %v2054, %v2146
        %v2148 = vpop.f32.mrf.mxu0
        %v2149 = vpop.f32.mrf.mxu0
        %v2150 = vadd.f32 %v2054, %v2149
        %v2151 = vpop.f32.mrf.mxu0
        %2152 = vmatprep.mubr.bf16.mxu0 0
        %2153 = vmatmul.mubr.bf16.gmra.mxu0 %v2025
        %v2154 = vpop.f32.mrf.mxu0
        %v2155 = vadd.f32 %v2054, %v2154
        %v2156 = vpop.f32.mrf.mxu0
        %v2157 = vpop.f32.mrf.mxu0
        %v2158 = vadd.f32 %v2054, %v2157
        %v2159 = vpop.f32.mrf.mxu0
        %2160 = vmatprep.mubr.bf16.mxu0 0
        %2161 = vmatmul.mubr.bf16.gmra.mxu0 %v2026
        %v2162 = vpop.f32.mrf.mxu0
        %v2163 = vadd.f32 %v2054, %v2162
        %v2164 = vpop.f32.mrf.mxu0
        %v2165 = vpop.f32.mrf.mxu0
        %v2166 = vadd.f32 %v2054, %v2165
        %v2167 = vpop.f32.mrf.mxu0
        %2168 = vmatprep.mubr.bf16.mxu0 0
        %2169 = vmatmul.mubr.bf16.gmra.mxu0 %v2027
        %v2170 = vpop.f32.mrf.mxu0
        %v2171 = vadd.f32 %v2054, %v2170
        %v2172 = vpop.f32.mrf.mxu0
        %v2173 = vpop.f32.mrf.mxu0
        %v2174 = vadd.f32 %v2054, %v2173
        %v2175 = vpop.f32.mrf.mxu0
        %2176 = vmatprep.mubr.bf16.mxu0 0
        %2177 = vmatmul.mubr.bf16.gmra.mxu0 %v2028
        %v2178 = vpop.f32.mrf.mxu0
        %v2179 = vadd.f32 %v2054, %v2178
        %v2180 = vpop.f32.mrf.mxu0
        %v2181 = vpop.f32.mrf.mxu0
        %v2182 = vadd.f32 %v2054, %v2181
        %v2183 = vpop.f32.mrf.mxu0
        %2184 = vmatprep.mubr.bf16.mxu0 0
        %2185 = vmatmul.mubr.bf16.gmra.mxu0 %v2029
        %v2186 = vpop.f32.mrf.mxu0
        %v2187 = vadd.f32 %v2054, %v2186
        %v2188 = vpop.f32.mrf.mxu0
        %v2189 = vpop.f32.mrf.mxu0
        %v2190 = vadd.f32 %v2054, %v2189
        %v2191 = vpop.f32.mrf.mxu0
        %2192 = vmatprep.mubr.bf16.mxu0 0
        %2193 = vmatmul.mubr.bf16.gmra.mxu0 %v2030
        %v2194 = vpop.f32.mrf.mxu0
        %v2195 = vadd.f32 %v2054, %v2194
        %v2196 = vpop.f32.mrf.mxu0
        %v2197 = vpop.f32.mrf.mxu0
        %v2198 = vadd.f32 %v2054, %v2197
        %v2199 = vpop.f32.mrf.mxu0
        %2200 = vdwg.mxu0
        %v2201 = vmax.f32 %v2139, 0.0
        %v2202 = vmax.f32 %v2142, 0.0
        %v2203 = vmax.f32 %v2147, 0.0
        %v2204 = vmax.f32 %v2150, 0.0
        %v2205 = vmax.f32 %v2155, 0.0
        %v2206 = vmax.f32 %v2158, 0.0
        %v2207 = vmax.f32 %v2163, 0.0
        %v2208 = vmax.f32 %v2166, 0.0
        %v2209 = vmax.f32 %v2171, 0.0
        %v2210 = vmax.f32 %v2174, 0.0
        %v2211 = vmax.f32 %v2179, 0.0
        %v2212 = vmax.f32 %v2182, 0.0
        %v2213 = vmax.f32 %v2187, 0.0
        %v2214 = vmax.f32 %v2190, 0.0
        %v2215 = vmax.f32 %v2195, 0.0
        %v2216 = vmax.f32 %v2198, 0.0
        %v2217 = vpack.c.bf16 %v2202, %v2201
        %v2218 = vpack.c.bf16 %v2204, %v2203
        %v2219 = vpack.c.bf16 %v2206, %v2205
        %v2220 = vpack.c.bf16 %v2208, %v2207
        %v2221 = vpack.c.bf16 %v2210, %v2209
        %v2222 = vpack.c.bf16 %v2212, %v2211
        %v2223 = vpack.c.bf16 %v2214, %v2213
        %v2224 = vpack.c.bf16 %v2216, %v2215
        %s2225 = scalar_lea.vmem [#allocation2], 576
        %v2226 = vld [vmem:[%s2225] sm:$0xf]
        %v2227 = vld [vmem:[%s2225 + $0x4] sm:$0xf]
        %v2228 = vld [vmem:[%s2225 + $0x8] sm:$0xf]
        %v2229 = vld [vmem:[%s2225 + $0xc] sm:$0xf]
        %v2230 = vld [vmem:[%s2225 + $0x10] sm:$0xf]
        %v2231 = vld [vmem:[%s2225 + $0x14] sm:$0xf]
        %v2232 = vld [vmem:[%s2225 + $0x18] sm:$0xf]
        %v2233 = vld [vmem:[%s2225 + $0x1c] sm:$0xf]
        %v2234 = vld [vmem:[%s2225 + $0x20] sm:$0xf]
        %v2235 = vld [vmem:[%s2225 + $0x24] sm:$0xf]
        %v2236 = vld [vmem:[%s2225 + $0x28] sm:$0xf]
        %v2237 = vld [vmem:[%s2225 + $0x2c] sm:$0xf]
        %v2238 = vld [vmem:[%s2225 + $0x30] sm:$0xf]
        %v2239 = vld [vmem:[%s2225 + $0x34] sm:$0xf]
        %v2240 = vld [vmem:[%s2225 + $0x38] sm:$0xf]
        %v2241 = vld [vmem:[%s2225 + $0x3c] sm:$0xf]
        %s2242 = scalar_lea.vmem %s4, 9
        %v2243 = vld [vmem:[%s2242] sm:$0x1]
        %v2245 = vlaneseq
        %v2246 = vshrl.u32 %v2245, 7
        %v2247 = vsub.s32 0, %v2246
        %v2248 = vrot.slane %v2243, %v2247
        %v2266 = vunpack.c.l.b16 %v2226
        %v2267 = vunpack.c.l.b16 %v2227
        %v2268 = vunpack.c.l.b16 %v2228
        %v2269 = vunpack.c.l.b16 %v2229
        %v2270 = vunpack.c.l.b16 %v2230
        %v2271 = vunpack.c.l.b16 %v2231
        %v2272 = vunpack.c.l.b16 %v2232
        %v2273 = vunpack.c.l.b16 %v2233
        %v2274 = vunpack.c.l.b16 %v2234
        %v2275 = vunpack.c.l.b16 %v2235
        %v2276 = vunpack.c.l.b16 %v2236
        %v2277 = vunpack.c.l.b16 %v2237
        %v2278 = vunpack.c.l.b16 %v2238
        %v2279 = vunpack.c.l.b16 %v2239
        %v2280 = vunpack.c.l.b16 %v2240
        %v2281 = vunpack.c.l.b16 %v2241
        %v2282 = vpack.c.b16 %v2267, %v2266
        %v2283 = vpack.c.b16 %v2269, %v2268
        %v2284 = vpack.c.b16 %v2271, %v2270
        %v2285 = vpack.c.b16 %v2273, %v2272
        %v2286 = vpack.c.b16 %v2275, %v2274
        %v2287 = vpack.c.b16 %v2277, %v2276
        %v2288 = vpack.c.b16 %v2279, %v2278
        %v2289 = vpack.c.b16 %v2281, %v2280
        %2298 = vmatprep.subr.bf16.mxu0 0
        %2299 = vmatpush1.bf16.msra.mxu0 %v2289
        %2300 = vmatprep.subr.bf16.mxu0 0
        %2301 = vmatpush1.bf16.msra.mxu0 %v2288
        %2302 = vmatprep.subr.bf16.mxu0 0
        %2303 = vmatpush1.bf16.msra.mxu0 %v2287
        %2304 = vmatprep.subr.bf16.mxu0 0
        %2305 = vmatpush1.bf16.msra.mxu0 %v2286
        %2306 = vmatprep.subr.bf16.mxu0 0
        %2307 = vmatpush1.bf16.msra.mxu0 %v2285
        %2308 = vmatprep.subr.bf16.mxu0 0
        %2309 = vmatpush1.bf16.msra.mxu0 %v2284
        %2310 = vmatprep.subr.bf16.mxu0 0
        %2311 = vmatpush1.bf16.msra.mxu0 %v2283
        %2312 = vmatprep.subr.bf16.mxu0 0
        %2313 = vmatpush1.bf16.msra.mxu0 %v2282
        %2314 = vmatprep.subr.bf16.mxu0 0
        %2315 = vmatpush2.bf16.msra.mxu0 0
        %2316 = vmatprep.subr.bf16.mxu0 0
        %2317 = vmatpush2.bf16.msra.mxu0 0
        %2318 = vmatprep.subr.bf16.mxu0 0
        %2319 = vmatpush2.bf16.msra.mxu0 0
        %2320 = vmatprep.subr.bf16.mxu0 0
        %2321 = vmatpush2.bf16.msra.mxu0 0
        %2322 = vmatprep.subr.bf16.mxu0 0
        %2323 = vmatpush2.bf16.msra.mxu0 0
        %2324 = vmatprep.subr.bf16.mxu0 0
        %2325 = vmatpush2.bf16.msra.mxu0 0
        %2326 = vmatprep.subr.bf16.mxu0 0
        %2327 = vmatpush2.bf16.msra.mxu0 0
        %2328 = vmatprep.subr.bf16.mxu0 0
        %2329 = vmatpush2.bf16.msra.mxu0 0
        %2330 = vmatprep.mubr.bf16.mxu0 0
        %2331 = vmatmul.mubr.bf16.gmra.mxu0 %v2217
        %v2332 = vpop.f32.mrf.mxu0
        %v2333 = vadd.f32 %v2248, %v2332
        %v2334 = vpop.f32.mrf.mxu0
        %v2335 = vpop.f32.mrf.mxu0
        %v2336 = vadd.f32 %v2248, %v2335
        %v2337 = vpop.f32.mrf.mxu0
        %2338 = vmatprep.mubr.bf16.mxu0 0
        %2339 = vmatmul.mubr.bf16.gmra.mxu0 %v2218
        %v2340 = vpop.f32.mrf.mxu0
        %v2341 = vadd.f32 %v2248, %v2340
        %v2342 = vpop.f32.mrf.mxu0
        %v2343 = vpop.f32.mrf.mxu0
        %v2344 = vadd.f32 %v2248, %v2343
        %v2345 = vpop.f32.mrf.mxu0
        %2346 = vmatprep.mubr.bf16.mxu0 0
        %2347 = vmatmul.mubr.bf16.gmra.mxu0 %v2219
        %v2348 = vpop.f32.mrf.mxu0
        %v2349 = vadd.f32 %v2248, %v2348
        %v2350 = vpop.f32.mrf.mxu0
        %v2351 = vpop.f32.mrf.mxu0
        %v2352 = vadd.f32 %v2248, %v2351
        %v2353 = vpop.f32.mrf.mxu0
        %2354 = vmatprep.mubr.bf16.mxu0 0
        %2355 = vmatmul.mubr.bf16.gmra.mxu0 %v2220
        %v2356 = vpop.f32.mrf.mxu0
        %v2357 = vadd.f32 %v2248, %v2356
        %v2358 = vpop.f32.mrf.mxu0
        %v2359 = vpop.f32.mrf.mxu0
        %v2360 = vadd.f32 %v2248, %v2359
        %v2361 = vpop.f32.mrf.mxu0
        %2362 = vmatprep.mubr.bf16.mxu0 0
        %2363 = vmatmul.mubr.bf16.gmra.mxu0 %v2221
        %v2364 = vpop.f32.mrf.mxu0
        %v2365 = vadd.f32 %v2248, %v2364
        %v2366 = vpop.f32.mrf.mxu0
        %v2367 = vpop.f32.mrf.mxu0
        %v2368 = vadd.f32 %v2248, %v2367
        %v2369 = vpop.f32.mrf.mxu0
        %2370 = vmatprep.mubr.bf16.mxu0 0
        %2371 = vmatmul.mubr.bf16.gmra.mxu0 %v2222
        %v2372 = vpop.f32.mrf.mxu0
        %v2373 = vadd.f32 %v2248, %v2372
        %v2374 = vpop.f32.mrf.mxu0
        %v2375 = vpop.f32.mrf.mxu0
        %v2376 = vadd.f32 %v2248, %v2375
        %v2377 = vpop.f32.mrf.mxu0
        %2378 = vmatprep.mubr.bf16.mxu0 0
        %2379 = vmatmul.mubr.bf16.gmra.mxu0 %v2223
        %v2380 = vpop.f32.mrf.mxu0
        %v2381 = vadd.f32 %v2248, %v2380
        %v2382 = vpop.f32.mrf.mxu0
        %v2383 = vpop.f32.mrf.mxu0
        %v2384 = vadd.f32 %v2248, %v2383
        %v2385 = vpop.f32.mrf.mxu0
        %2386 = vmatprep.mubr.bf16.mxu0 0
        %2387 = vmatmul.mubr.bf16.gmra.mxu0 %v2224
        %v2388 = vpop.f32.mrf.mxu0
        %v2389 = vadd.f32 %v2248, %v2388
        %v2390 = vpop.f32.mrf.mxu0
        %v2391 = vpop.f32.mrf.mxu0
        %v2392 = vadd.f32 %v2248, %v2391
        %v2393 = vpop.f32.mrf.mxu0
        %2394 = vdwg.mxu0
        %v2395 = vmax.f32 %v2333, 0.0
        %v2396 = vmax.f32 %v2336, 0.0
        %v2397 = vmax.f32 %v2341, 0.0
        %v2398 = vmax.f32 %v2344, 0.0
        %v2399 = vmax.f32 %v2349, 0.0
        %v2400 = vmax.f32 %v2352, 0.0
        %v2401 = vmax.f32 %v2357, 0.0
        %v2402 = vmax.f32 %v2360, 0.0
        %v2403 = vmax.f32 %v2365, 0.0
        %v2404 = vmax.f32 %v2368, 0.0
        %v2405 = vmax.f32 %v2373, 0.0
        %v2406 = vmax.f32 %v2376, 0.0
        %v2407 = vmax.f32 %v2381, 0.0
        %v2408 = vmax.f32 %v2384, 0.0
        %v2409 = vmax.f32 %v2389, 0.0
        %v2410 = vmax.f32 %v2392, 0.0
        %v2411 = vpack.c.bf16 %v2396, %v2395
        %v2412 = vpack.c.bf16 %v2398, %v2397
        %v2413 = vpack.c.bf16 %v2400, %v2399
        %v2414 = vpack.c.bf16 %v2402, %v2401
        %v2415 = vpack.c.bf16 %v2404, %v2403
        %v2416 = vpack.c.bf16 %v2406, %v2405
        %v2417 = vpack.c.bf16 %v2408, %v2407
        %v2418 = vpack.c.bf16 %v2410, %v2409
        %v2419 = vld [vmem:[%s5] sm:$0xf]
        %v2420 = vld [vmem:[%s5 + $0x4] sm:$0xf]
        %v2421 = vld [vmem:[%s5 + $0x8] sm:$0xf]
        %v2422 = vld [vmem:[%s5 + $0xc] sm:$0xf]
        %v2423 = vld [vmem:[%s5 + $0x10] sm:$0xf]
        %v2424 = vld [vmem:[%s5 + $0x14] sm:$0xf]
        %v2425 = vld [vmem:[%s5 + $0x18] sm:$0xf]
        %v2426 = vld [vmem:[%s5 + $0x1c] sm:$0xf]
        %v2427 = vld [vmem:[%s5 + $0x20] sm:$0xf]
        %v2428 = vld [vmem:[%s5 + $0x24] sm:$0xf]
        %v2429 = vld [vmem:[%s5 + $0x28] sm:$0xf]
        %v2430 = vld [vmem:[%s5 + $0x2c] sm:$0xf]
        %v2431 = vld [vmem:[%s5 + $0x30] sm:$0xf]
        %v2432 = vld [vmem:[%s5 + $0x34] sm:$0xf]
        %v2433 = vld [vmem:[%s5 + $0x38] sm:$0xf]
        %v2434 = vld [vmem:[%s5 + $0x3c] sm:$0xf]
        %v2435 = vld [vmem:[%s6] sm:$0x1]
        %v2437 = vlaneseq
        %v2438 = vshrl.u32 %v2437, 7
        %v2439 = vsub.s32 0, %v2438
        %v2440 = vrot.slane %v2435, %v2439
        %v2458 = vunpack.c.l.b16 %v2419
        %v2459 = vunpack.c.l.b16 %v2420
        %v2460 = vunpack.c.l.b16 %v2421
        %v2461 = vunpack.c.l.b16 %v2422
        %v2462 = vunpack.c.l.b16 %v2423
        %v2463 = vunpack.c.l.b16 %v2424
        %v2464 = vunpack.c.l.b16 %v2425
        %v2465 = vunpack.c.l.b16 %v2426
        %v2466 = vunpack.c.l.b16 %v2427
        %v2467 = vunpack.c.l.b16 %v2428
        %v2468 = vunpack.c.l.b16 %v2429
        %v2469 = vunpack.c.l.b16 %v2430
        %v2470 = vunpack.c.l.b16 %v2431
        %v2471 = vunpack.c.l.b16 %v2432
        %v2472 = vunpack.c.l.b16 %v2433
        %v2473 = vunpack.c.l.b16 %v2434
        %v2474 = vpack.c.b16 %v2459, %v2458
        %v2475 = vpack.c.b16 %v2461, %v2460
        %v2476 = vpack.c.b16 %v2463, %v2462
        %v2477 = vpack.c.b16 %v2465, %v2464
        %v2478 = vpack.c.b16 %v2467, %v2466
        %v2479 = vpack.c.b16 %v2469, %v2468
        %v2480 = vpack.c.b16 %v2471, %v2470
        %v2481 = vpack.c.b16 %v2473, %v2472
        %2490 = vmatprep.subr.bf16.mxu0 0
        %2491 = vmatpush1.bf16.msra.mxu0 %v2481
        %2492 = vmatprep.subr.bf16.mxu0 0
        %2493 = vmatpush1.bf16.msra.mxu0 %v2480
        %2494 = vmatprep.subr.bf16.mxu0 0
        %2495 = vmatpush1.bf16.msra.mxu0 %v2479
        %2496 = vmatprep.subr.bf16.mxu0 0
        %2497 = vmatpush1.bf16.msra.mxu0 %v2478
        %2498 = vmatprep.subr.bf16.mxu0 0
        %2499 = vmatpush1.bf16.msra.mxu0 %v2477
        %2500 = vmatprep.subr.bf16.mxu0 0
        %2501 = vmatpush1.bf16.msra.mxu0 %v2476
        %2502 = vmatprep.subr.bf16.mxu0 0
        %2503 = vmatpush1.bf16.msra.mxu0 %v2475
        %2504 = vmatprep.subr.bf16.mxu0 0
        %2505 = vmatpush1.bf16.msra.mxu0 %v2474
        %2506 = vmatprep.subr.bf16.mxu0 0
        %2507 = vmatpush2.bf16.msra.mxu0 0
        %2508 = vmatprep.subr.bf16.mxu0 0
        %2509 = vmatpush2.bf16.msra.mxu0 0
        %2510 = vmatprep.subr.bf16.mxu0 0
        %2511 = vmatpush2.bf16.msra.mxu0 0
        %2512 = vmatprep.subr.bf16.mxu0 0
        %2513 = vmatpush2.bf16.msra.mxu0 0
        %2514 = vmatprep.subr.bf16.mxu0 0
        %2515 = vmatpush2.bf16.msra.mxu0 0
        %2516 = vmatprep.subr.bf16.mxu0 0
        %2517 = vmatpush2.bf16.msra.mxu0 0
        %2518 = vmatprep.subr.bf16.mxu0 0
        %2519 = vmatpush2.bf16.msra.mxu0 0
        %2520 = vmatprep.subr.bf16.mxu0 0
        %2521 = vmatpush2.bf16.msra.mxu0 0
        %2522 = vmatprep.mubr.bf16.mxu0 0
        %2523 = vmatmul.mubr.bf16.gmra.mxu0 %v2411
        %v2524 = vpop.f32.mrf.mxu0
        %v2525 = vadd.f32 %v2440, %v2524
        %v2526 = vpop.f32.mrf.mxu0
        %v2527 = vpop.f32.mrf.mxu0
        %v2528 = vadd.f32 %v2440, %v2527
        %v2529 = vpop.f32.mrf.mxu0
        %2530 = vmatprep.mubr.bf16.mxu0 0
        %2531 = vmatmul.mubr.bf16.gmra.mxu0 %v2412
        %v2532 = vpop.f32.mrf.mxu0
        %v2533 = vadd.f32 %v2440, %v2532
        %v2534 = vpop.f32.mrf.mxu0
        %v2535 = vpop.f32.mrf.mxu0
        %v2536 = vadd.f32 %v2440, %v2535
        %v2537 = vpop.f32.mrf.mxu0
        %2538 = vmatprep.mubr.bf16.mxu0 0
        %2539 = vmatmul.mubr.bf16.gmra.mxu0 %v2413
        %v2540 = vpop.f32.mrf.mxu0
        %v2541 = vadd.f32 %v2440, %v2540
        %v2542 = vpop.f32.mrf.mxu0
        %v2543 = vpop.f32.mrf.mxu0
        %v2544 = vadd.f32 %v2440, %v2543
        %v2545 = vpop.f32.mrf.mxu0
        %2546 = vmatprep.mubr.bf16.mxu0 0
        %2547 = vmatmul.mubr.bf16.gmra.mxu0 %v2414
        %v2548 = vpop.f32.mrf.mxu0
        %v2549 = vadd.f32 %v2440, %v2548
        %v2550 = vpop.f32.mrf.mxu0
        %v2551 = vpop.f32.mrf.mxu0
        %v2552 = vadd.f32 %v2440, %v2551
        %v2553 = vpop.f32.mrf.mxu0
        %2554 = vmatprep.mubr.bf16.mxu0 0
        %2555 = vmatmul.mubr.bf16.gmra.mxu0 %v2415
        %v2556 = vpop.f32.mrf.mxu0
        %v2557 = vadd.f32 %v2440, %v2556
        %v2558 = vpop.f32.mrf.mxu0
        %v2559 = vpop.f32.mrf.mxu0
        %v2560 = vadd.f32 %v2440, %v2559
        %v2561 = vpop.f32.mrf.mxu0
        %2562 = vmatprep.mubr.bf16.mxu0 0
        %2563 = vmatmul.mubr.bf16.gmra.mxu0 %v2416
        %v2564 = vpop.f32.mrf.mxu0
        %v2565 = vadd.f32 %v2440, %v2564
        %v2566 = vpop.f32.mrf.mxu0
        %v2567 = vpop.f32.mrf.mxu0
        %v2568 = vadd.f32 %v2440, %v2567
        %v2569 = vpop.f32.mrf.mxu0
        %2570 = vmatprep.mubr.bf16.mxu0 0
        %2571 = vmatmul.mubr.bf16.gmra.mxu0 %v2417
        %v2572 = vpop.f32.mrf.mxu0
        %v2573 = vadd.f32 %v2440, %v2572
        %v2574 = vpop.f32.mrf.mxu0
        %v2575 = vpop.f32.mrf.mxu0
        %v2576 = vadd.f32 %v2440, %v2575
        %v2577 = vpop.f32.mrf.mxu0
        %2578 = vmatprep.mubr.bf16.mxu0 0
        %2579 = vmatmul.mubr.bf16.gmra.mxu0 %v2418
        %v2580 = vpop.f32.mrf.mxu0
        %v2581 = vadd.f32 %v2440, %v2580
        %v2582 = vpop.f32.mrf.mxu0
        %v2583 = vpop.f32.mrf.mxu0
        %v2584 = vadd.f32 %v2440, %v2583
        %v2585 = vpop.f32.mrf.mxu0
        %2586 = vdwg.mxu0
        %2587 = vst [vmem:[%s287] sm:$0xff] %v2525
        %2588 = vst [vmem:[%s287 + $0x8] sm:$0xff] %v2528
        %2589 = vst [vmem:[%s287 + $0x10] sm:$0xff] %v2533
        %2590 = vst [vmem:[%s287 + $0x18] sm:$0xff] %v2536
        %2591 = vst [vmem:[%s287 + $0x20] sm:$0xff] %v2541
        %2592 = vst [vmem:[%s287 + $0x28] sm:$0xff] %v2544
        %2593 = vst [vmem:[%s287 + $0x30] sm:$0xff] %v2549
        %2594 = vst [vmem:[%s287 + $0x38] sm:$0xff] %v2552
        %2595 = vst [vmem:[%s287 + $0x40] sm:$0xff] %v2557
        %2596 = vst [vmem:[%s287 + $0x48] sm:$0xff] %v2560
        %2597 = vst [vmem:[%s287 + $0x50] sm:$0xff] %v2565
        %2598 = vst [vmem:[%s287 + $0x58] sm:$0xff] %v2568
        %2599 = vst [vmem:[%s287 + $0x60] sm:$0xff] %v2573
        %2600 = vst [vmem:[%s287 + $0x68] sm:$0xff] %v2576
        %2601 = vst [vmem:[%s287 + $0x70] sm:$0xff] %v2581
        %2602 = vst [vmem:[%s287 + $0x78] sm:$0xff] %v2584
        %s2603 = sand.u32 %s182, 1
        %s2604 = scalar_lea.sflag [#allocation4], %s2603
        %s2605 = sand.u32 %s182, 1
        %s2606 = smul.addr %s2605, 128
        %s2607 = scalar_lea.vmem [#allocation5], %s2606
        // Predicated region
        $region53: #{tpu_custom_call.1} parent=47 // pred_check
          %p2608 = pneg %p192
        $region54: #{tpu_custom_call.1} parent=47 // pred_check_branch
          %2610 = sbr.rel (%p2608) target = $region56
        $region55: #{tpu_custom_call.1} parent=47 // pred_region
          %s2611 = smul.u32 16, %s22
          %s2613 = ssub.s32 2048, 2048
          %2614 = vsyncadd %s2604, %s2613
          %s2615 = smul.addr %s2611, 128
          %s2616 = scalar_lea.hbm %s7, %s2615
          %s2617 = sshll.u32 %s2607, 4
          %s2618 = int_to_ptr.vmem [resolvable:$true] %s2617
          %2623 = dma.vmem_to_hbm [thread:$0]  %s2618, 2048, %s2616, %s2604, 128, 128, 8
        $region56: #{tpu_custom_call.1} parent=47 // pred_fallthru
          _
      $region48: #{tpu_custom_call.1} parent=5 // pred_fallthru
        _
      %p2624 = scmp.le.s32.totalorder 2, %s17
      // Predicated region
      $region57: #{tpu_custom_call.1} parent=5 // pred_check
        %p2625 = pneg %p2624
      $region58: #{tpu_custom_call.1} parent=5 // pred_check_branch
        %2627 = sbr.rel (%p2625) target = $region60
      $region59: #{tpu_custom_call.1} parent=5 // pred_region
        %s2628 = ssub.s32 %s17, 2
        // Predicated region
        $region61: #{tpu_custom_call.1} parent=59 // pred_check
          %p2629 = pneg %p198
        $region62: #{tpu_custom_call.1} parent=59 // pred_check_branch
          %2631 = sbr.rel (%p2629) target = $region64
        $region63: #{tpu_custom_call.1} parent=59 // pred_region
          %s2632 = sand.u32 %s183, 1
          %s2633 = scalar_lea.sflag [#allocation4], %s2632
          %s2634 = sand.u32 %s183, 1
          %s2635 = smul.addr %s2634, 128
          %s2636 = scalar_lea.vmem [#allocation5], %s2635
          %2637 = dma.done %s2633, 2048
        $region64: #{tpu_custom_call.1} parent=59 // pred_fallthru
          _
      $region60: #{tpu_custom_call.1} parent=5 // pred_fallthru
        _
    $region6: #{tpu_custom_call.1} parent=1 // loop_footer
      %s21 = sadd.s32 1, %s17
    $region7: #{tpu_custom_call.1} parent=1 // loop_footer_branch
      %16 = sbr.rel target = $region3
    $region8: #{tpu_custom_call.1} parent=1 // loop_exit
      _
    %2638 = vsyncpa [#allocation3], 1
    %s2639 = scalar_lea.sflag [#allocation3], 1
    %2640 = vsyncpa %s2639, 1
    %2641 = vsyncpa [#allocation4], 1
    %s2642 = scalar_lea.sflag [#allocation4], 1
    %2643 = vsyncpa %s2642, 1

</llo_original>
